<compile_context>
chip_gen: v5e
topology: v5e:2x2
jax: 0.10.0
libtpu: 0.0.40
codegen_flags: <defaults>
</compile_context>

<pallas_src>
import functools

import jax
import jax.numpy as jnp
from jax.experimental import pallas as pl
from jax.experimental.pallas import tpu as pltpu


# ---------------------------------------------------------------------------
# densePool: 4 shifted average pools as two selector matmuls (MXU), channel-last
# ---------------------------------------------------------------------------

def _window_selector(out_len, in_len, k, s, shift):
    """sel[i, r] = 1 iff r lies in the pooling window of output i shifted by `shift`."""
    i = jnp.arange(out_len)[:, None]
    r = jnp.arange(in_len)[None, :]
    start = shift + i * s
    return ((r >= start) & (r < start + k)).astype(jnp.float32)


def _dense_pool_kernel(a_ref, b_ref, x_ref, o_ref):
    """a_ref: (2Ho, H) row selectors (dy-major, x.dtype)
       b_ref: (2Wo, W) col selectors (dx-major, f32, pre-scaled by 1/k^2)
       x_ref: (H, W, TN) input tile, B*C in lanes
       o_ref: (2Ho, 2Wo, TN) lane-dense output slab."""
    # contract H:  (2Ho, H) @ (H, W, TN) -> (2Ho, W, TN)
    t = jax.lax.dot_general(a_ref[...], x_ref[...], (((1,), (0,)), ((), ())),
                            preferred_element_type=jnp.float32)
    # cheap minor-dim swap so W is the contraction (minor) dim of the lhs
    t = jnp.swapaxes(t, 1, 2)                                   # (2Ho, TN, W)
    # contract W:  (2Ho, TN, W) x (2Wo, W) -> (2Ho, TN, 2Wo)
    o = jax.lax.dot_general(t, b_ref[...], (((2,), (1,)), ((), ())),
                            preferred_element_type=jnp.float32)
    # store lane-dense: N (channels*batch) stays in the 128-lane dimension
    o_ref[...] = jnp.swapaxes(o, 1, 2).astype(o_ref.dtype)      # (2Ho, 2Wo, TN)


def dense_pool_nhwc(x, kernel_size=2, stride_size=2, *, tile_n=512):
    """densePool on a channel-last tensor x:(B,H,W,C) -> (B,Ho,Wo,4C),
    output channel order = 4*c + v with v in {no_pad, right, down, right_down}."""
    B, H, W, C = x.shape
    k, s = int(kernel_size), int(stride_size)
    Ho = (H - k) // s + 1
    Wo = (W - k) // s + 1
    N = B * C

    # (H, W, B*C): the large B*C axis goes into the lane dimension.
    x_l = jnp.transpose(x, (1, 2, 0, 3)).reshape(H, W, N)

    if N >= 128:
        tn = max(128, (min(tile_n, N) // 128) * 128)   # lane-aligned tile
        Np = -(-N // tn) * tn
    else:
        tn, Np = N, N                                   # full-dim lanes for tiny N
    if Np != N:
        x_l = jnp.pad(x_l, ((0, 0), (0, 0), (0, Np - N)))

    # concatenated shift-0 / shift-1 selectors; 1/k^2 folded into the col selector
    a_sel = jnp.concatenate([_window_selector(Ho, H, k, s, 0),
                             _window_selector(Ho, H, k, s, 1)], axis=0).astype(x.dtype)
    b_sel = (jnp.concatenate([_window_selector(Wo, W, k, s, 0),
                              _window_selector(Wo, W, k, s, 1)], axis=0)
             * (1.0 / float(k * k))).astype(jnp.float32)

    out = pl.pallas_call(
        _dense_pool_kernel,
        out_shape=jax.ShapeDtypeStruct((2 * Ho, 2 * Wo, Np), x.dtype),
        grid=(Np // tn,),
        in_specs=[
            pl.BlockSpec((2 * Ho, H), lambda i: (0, 0)),
            pl.BlockSpec((2 * Wo, W), lambda i: (0, 0)),
            pl.BlockSpec((H, W, tn), lambda i: (0, 0, i)),
        ],
        out_specs=pl.BlockSpec((2 * Ho, 2 * Wo, tn), lambda i: (0, 0, i)),
        compiler_params=pltpu.CompilerParams(
            dimension_semantics=("parallel",),
            vmem_limit_bytes=48 * 1024 * 1024,
        ),
    )(a_sel, b_sel, x_l)

    # (dy*Ho+ho, dx*Wo+wo, b*C+c) -> (B, Ho, Wo, 4*C) with channel = 4*c + 2*dy + dx
    out = out[:, :, :N].reshape(2, Ho, 2, Wo, B, C)
    out = jnp.transpose(out, (4, 1, 3, 5, 0, 2)).reshape(B, Ho, Wo, C * 4)
    return out


# ---------------------------------------------------------------------------
# 1x1 conv (pointwise matmul) fused with BatchNorm / bias / ReLU / residual
# ---------------------------------------------------------------------------

def _matmul_affine_kernel(x_ref, w_ref, s_ref, b_ref, o_ref, *, relu):
    y = jnp.dot(x_ref[...], w_ref[...], preferred_element_type=jnp.float32)
    y = y * s_ref[...] + b_ref[...]
    if relu:
        y = jnp.maximum(y, 0.0)
    o_ref[...] = y.astype(o_ref.dtype)


def _matmul_affine_residual_kernel(x_ref, w_ref, s_ref, b_ref, r_ref, o_ref, *, relu):
    y = jnp.dot(x_ref[...], w_ref[...], preferred_element_type=jnp.float32)
    y = y * s_ref[...] + b_ref[...] + r_ref[...].astype(jnp.float32)
    if relu:
        y = jnp.maximum(y, 0.0)
    o_ref[...] = y.astype(o_ref.dtype)


def matmul_affine(x2d, w, scale, shift, *, relu, residual=None, tile_m=256):
    """out = maybe_relu((x2d @ w) * scale + shift [+ residual]);  channel-last."""
    M, Cin = x2d.shape
    Cout = w.shape[1]
    w = w.astype(x2d.dtype)
    s2 = scale.reshape(1, Cout).astype(jnp.float32)
    b2 = shift.reshape(1, Cout).astype(jnp.float32)

    if M > tile_m:
        tm = tile_m
        Mp = -(-M // tm) * tm
    else:
        tm, Mp = M, M
    xp = x2d if Mp == M else jnp.pad(x2d, ((0, Mp - M), (0, 0)))

    args = [xp, w, s2, b2]
    in_specs = [
        pl.BlockSpec((tm, Cin), lambda i: (i, 0)),
        pl.BlockSpec((Cin, Cout), lambda i: (0, 0)),
        pl.BlockSpec((1, Cout), lambda i: (0, 0)),
        pl.BlockSpec((1, Cout), lambda i: (0, 0)),
    ]
    if residual is None:
        kernel = functools.partial(_matmul_affine_kernel, relu=relu)
    else:
        rp = residual if Mp == M else jnp.pad(residual, ((0, Mp - M), (0, 0)))
        args.append(rp)
        in_specs.append(pl.BlockSpec((tm, Cout), lambda i: (i, 0)))
        kernel = functools.partial(_matmul_affine_residual_kernel, relu=relu)

    out = pl.pallas_call(
        kernel,
        out_shape=jax.ShapeDtypeStruct((Mp, Cout), x2d.dtype),
        grid=(Mp // tm,),
        in_specs=in_specs,
        out_specs=pl.BlockSpec((tm, Cout), lambda i: (i, 0)),
        compiler_params=pltpu.CompilerParams(dimension_semantics=("parallel",)),
    )(*args)
    return out if Mp == M else out[:M]


# ---------------------------------------------------------------------------
# grouped 3x3 conv (groups=G, 4 in-channels / 1 out-channel per group) + bias
# ---------------------------------------------------------------------------

def _group_conv3x3_kernel(xp_ref, w_ref, b_ref, o_ref):
    """xp_ref: (1, Hs+2, Ws+2, 4G) zero-padded image, channel-last
       w_ref:  (9, 4G, G) block-diagonal per-tap weight matrices
       b_ref:  (1, G)     bias
       o_ref:  (1, Hs, Ws, G)."""
    _, Hs, Ws, G = o_ref.shape
    acc = jnp.zeros((Hs, Ws, G), jnp.float32)
    for ky in range(3):
        for kx in range(3):
            win = xp_ref[0, ky:ky + Hs, kx:kx + Ws, :]            # (Hs, Ws, 4G)
            acc = acc + jax.lax.dot_general(
                win, w_ref[ky * 3 + kx], (((2,), (0,)), ((), ())),
                preferred_element_type=jnp.float32)               # (Hs, Ws, G)
    o_ref[0] = (acc + b_ref[...]).astype(o_ref.dtype)


def grouped_conv3x3_nhwc(x, w, bias):
    """x: (B, Hs, Ws, 4G) channel-last (channel = 4*g + j); w: (G, 4, 3, 3) torch
    layout; bias: (G,). Returns (B, Hs, Ws, G).  The 9 taps are expressed as
    block-diagonal (4G, G) matmuls so the group reduction happens on the MXU."""
    B, Hs, Ws, C4 = x.shape
    G = w.shape[0]
    # TODO(synk): only the Bottleneck configuration (1 output channel per group)
    # is implemented; general AA_Group with ceil_channel > in_channel would need
    # cout_per_group > 1 here.
    assert w.shape[1] * G == C4, "expected cout_per_group == 1 (Bottleneck config)"

    xp = jnp.pad(x, ((0, 0), (1, 1), (1, 1), (0, 0)))              # padding=1
    w_t = jnp.transpose(w, (2, 3, 0, 1)).reshape(9, G, w.shape[1])  # (9, G, 4)
    eye = jnp.eye(G, dtype=w.dtype)
    wmats = (w_t[:, :, :, None] * eye[None, :, None, :]).reshape(9, C4, G)
    b2 = bias.reshape(1, G).astype(jnp.float32)

    return pl.pallas_call(
        _group_conv3x3_kernel,
        out_shape=jax.ShapeDtypeStruct((B, Hs, Ws, G), x.dtype),
        grid=(B,),
        in_specs=[
            pl.BlockSpec((1, Hs + 2, Ws + 2, C4), lambda b: (b, 0, 0, 0)),
            pl.BlockSpec((9, C4, G), lambda b: (0, 0, 0)),
            pl.BlockSpec((1, G), lambda b: (0, 0)),
        ],
        out_specs=pl.BlockSpec((1, Hs, Ws, G), lambda b: (b, 0, 0, 0)),
        compiler_params=pltpu.CompilerParams(dimension_semantics=("parallel",)),
    )(xp, wmats, b2)


# ---------------------------------------------------------------------------
# Bottleneck forward (Pallas pipeline)
# ---------------------------------------------------------------------------

def _bn_scale_shift(bn_params, eps=1e-5):
    gamma, beta, mean, var = bn_params
    s = gamma / jnp.sqrt(var + eps)
    return s, beta - mean * s


def bottleneck_forward(x, params, stride=2):
    """x: (B, in_planes, H, W) NCHW; returns (B, 4*planes, Ho, Wo) NCHW."""
    B, Cin, H, W = x.shape
    P = params['conv1_w'].shape[0]
    E = params['conv3_w'].shape[0]

    x_nhwc = jnp.transpose(x, (0, 2, 3, 1))                               # (B,H,W,Cin)

    # conv1 (1x1, no bias) + bn1 + relu
    s1, t1 = _bn_scale_shift(params['bn1'])
    w1 = params['conv1_w'][:, :, 0, 0].T                                  # (Cin, P)
    h = matmul_affine(x_nhwc.reshape(-1, Cin), w1, s1, t1, relu=True)
    h = h.reshape(B, H, W, P)

    # AA_Group: densePool -> grouped 3x3 conv (+bias) -> 1x1 aggregate (+bias)
    pooled = dense_pool_nhwc(h, kernel_size=2, stride_size=2)             # (B,Ho,Wo,4P)
    g = grouped_conv3x3_nhwc(pooled, params['group_w'], params['group_b'])
    _, Ho, Wo, Pc = g.shape
    # cnn_aggregate fused with bn2 + relu
    s2, t2 = _bn_scale_shift(params['bn2'])
    wa = params['agg_w'][:, :, 0, 0].T                                    # (Pc, P)
    h2 = matmul_affine(g.reshape(-1, Pc), wa, s2,
                       params['agg_b'] * s2 + t2, relu=True)              # (B*Ho*Wo, P)

    # shortcut: 1x1 conv (stride) + bn
    s_sc, t_sc = _bn_scale_shift(params['bn_sc'])
    wsc = params['shortcut_w'][:, :, 0, 0].T                              # (Cin, E)
    xs = x_nhwc[:, ::stride, ::stride, :]
    assert xs.shape[1] == Ho and xs.shape[2] == Wo, "shortcut/main spatial mismatch"
    r = matmul_affine(xs.reshape(-1, Cin), wsc, s_sc, t_sc, relu=False)   # (B*Ho*Wo, E)

    # conv3 + bn3 + residual add + relu, fused in one kernel
    s3, t3 = _bn_scale_shift(params['bn3'])
    w3 = params['conv3_w'][:, :, 0, 0].T                                  # (P, E)
    out = matmul_affine(h2, w3, s3, t3, relu=True, residual=r)            # (B*Ho*Wo, E)

    out = out.reshape(B, Ho, Wo, E)
    return jnp.transpose(out, (0, 3, 1, 2))                               # NCHW


# ---------------------------------------------------------------------------
# Pure-JAX reference (mirrors the PyTorch module)
# ---------------------------------------------------------------------------

def _dense_pool_reference_nchw(x, k, s):
    B, C, H, W = x.shape
    Ho = (H - k) // s + 1
    Wo = (W - k) // s + 1
    xp = jnp.pad(x, ((0, 0), (0, 0), (0, 1), (0, 1)))
    outs = []
    for dy, dx in ((0, 0), (0, 1), (1, 0), (1, 1)):
        acc = jnp.zeros((B, C, Ho, Wo), jnp.float32)
        for ky in range(k):
            for kx in range(k):
                acc = acc + xp[:, :,
                               dy + ky: dy + ky + (Ho - 1) * s + 1: s,
                               dx + kx: dx + kx + (Wo - 1) * s + 1: s]
        outs.append(acc / float(k * k))
    return jnp.stack(outs, axis=2).reshape(B, C * 4, Ho, Wo).astype(x.dtype)


def bottleneck_reference(x, params, stride=2):
    eps = 1e-5

    def bn(y, p):
        g, b, m, v = p
        inv = g / jnp.sqrt(v + eps)
        return y * inv[None, :, None, None] + (b - m * inv)[None, :, None, None]

    def conv(y, w, stride=1, padding='VALID', groups=1):
        return jax.lax.conv_general_dilated(
            y, w, (stride, stride), padding,
            dimension_numbers=('NCHW', 'OIHW', 'NCHW'),
            feature_group_count=groups)

    P = params['conv1_w'].shape[0]
    h = jax.nn.relu(bn(conv(x, params['conv1_w']), params['bn1']))
    pooled = _dense_pool_reference_nchw(h, 2, 2)
    g = conv(pooled, params['group_w'], padding=((1, 1), (1, 1)), groups=P) \
        + params['group_b'][None, :, None, None]
    a = conv(g, params['agg_w']) + params['agg_b'][None, :, None, None]
    h2 = jax.nn.relu(bn(a, params['bn2']))
    main = bn(conv(h2, params['conv3_w']), params['bn3'])
    sc = bn(conv(x, params['shortcut_w'], stride=stride), params['bn_sc'])
    return jax.nn.relu(main + sc)


# ---------------------------------------------------------------------------
# Deterministic parameters + self-test
# ---------------------------------------------------------------------------

def init_params(key, in_planes, planes):
    E = 4 * planes
    ks = jax.random.split(key, 24)

    def nrm(i, shape, scale=1.0):
        return scale * jax.random.normal(ks[i], shape, jnp.float32)

    def bn(i, c):
        return (1.0 + 0.1 * jax.random.normal(ks[i], (c,), jnp.float32),
                0.1 * jax.random.normal(ks[i + 1], (c,), jnp.float32),
                0.1 * jax.random.normal(ks[i + 2], (c,), jnp.float32),
                jax.random.uniform(ks[i + 3], (c,), jnp.float32, minval=0.5, maxval=1.5))

    return dict(
        conv1_w=nrm(0, (planes, in_planes, 1, 1), (1.0 / in_planes) ** 0.5),
        bn1=bn(1, planes),
        group_w=nrm(5, (planes, 4, 3, 3), (1.0 / 36.0) ** 0.5),
        group_b=0.1 * jax.random.normal(ks[6], (planes,), jnp.float32),
        agg_w=nrm(7, (planes, planes, 1, 1), (1.0 / planes) ** 0.5),
        agg_b=0.1 * jax.random.normal(ks[8], (planes,), jnp.float32),
        bn2=bn(9, planes),
        conv3_w=nrm(13, (E, planes, 1, 1), (1.0 / planes) ** 0.5),
        bn3=bn(14, E),
        shortcut_w=nrm(18, (E, in_planes, 1, 1), (1.0 / in_planes) ** 0.5),
        bn_sc=bn(19, E),
    )


if __name__ == "__main__":
    in_planes, planes, stride = 4, 4, 2
    B, H, W = 2, 16, 16

    key = jax.random.PRNGKey(0)
    kx, kp = jax.random.split(key)
    x = jax.random.normal(kx, (B, in_planes, H, W), jnp.float32)   # NCHW
    params = init_params(kp, in_planes, planes)

    # standalone check of the densePool Pallas kernel
    dp = dense_pool_nhwc(jnp.transpose(x, (0, 2, 3, 1)), 2, 2)
    dp = jnp.transpose(dp, (0, 3, 1, 2))
    dp_ref = _dense_pool_reference_nchw(x, 2, 2)
    assert jnp.allclose(dp, dp_ref, atol=1e-4, rtol=1e-4), \
        float(jnp.max(jnp.abs(dp - dp_ref)))

    # full Bottleneck forward
    out = bottleneck_forward(x, params, stride=stride)
    out = jax.block_until_ready(out)

    ref = bottleneck_reference(x, params, stride=stride)
    assert out.shape == ref.shape == (B, 4 * planes, H // 2, W // 2), (out.shape, ref.shape)
    max_err = float(jnp.max(jnp.abs(out - ref)))
    assert jnp.allclose(out, ref, atol=2e-3, rtol=2e-3), max_err

    print("KERNEL_OK")
</pallas_src>

<mosaic_0001>
module attributes {stable_mosaic.version = 11 : i64} {
  func.func @_dense_pool_kernel(%arg0: i32, %arg1: memref<16x16xf32, #tpu.memory_space<vmem>>, %arg2: memref<16x16xf32, #tpu.memory_space<vmem>>, %arg3: memref<16x16x8xf32, #tpu.memory_space<vmem>>, %arg4: memref<16x16x8xf32, #tpu.memory_space<vmem>>) attributes {dimension_semantics = [#tpu.dimension_semantics<parallel>], iteration_bounds = array<i64: 1>, scalar_prefetch = 0 : i64, scratch_operands = 0 : i64, tpu.core_type = #tpu.core_type<tc>, window_params = [{pipeline_mode = #tpu.pipeline_mode<synchronous>, transform_indices = @transform_0, window_bounds = array<i64: 16, 16>}, {pipeline_mode = #tpu.pipeline_mode<synchronous>, transform_indices = @transform_1, window_bounds = array<i64: 16, 16>}, {transform_indices = @transform_2, window_bounds = array<i64: 16, 16, 8>}, {transform_indices = @transform_3, window_bounds = array<i64: 16, 16, 8>}]} {
    %c0 = arith.constant 0 : index
    %c0_0 = arith.constant 0 : index
    %0 = vector.load %arg1[%c0, %c0_0] : memref<16x16xf32, #tpu.memory_space<vmem>>, vector<16x16xf32>
    %c0_1 = arith.constant 0 : index
    %c0_2 = arith.constant 0 : index
    %c0_3 = arith.constant 0 : index
    %1 = vector.load %arg3[%c0_1, %c0_2, %c0_3] : memref<16x16x8xf32, #tpu.memory_space<vmem>>, vector<16x16x8xf32>
    %cst = arith.constant dense<0.000000e+00> : vector<16x16x8xf32>
    %2 = tpu.matmul %0, %1, %cst {dimension_numbers = #tpu.dot_dimension_numbers<[1], [0], [0], [1, 2], [0, 0, 1, 1, 1, 2], [], []>} : vector<16x16xf32>, vector<16x16x8xf32>, vector<16x16x8xf32> -> vector<16x16x8xf32>
    %3 = tpu.transpose %2, [0, 2, 1] : vector<16x16x8xf32> -> vector<16x8x16xf32>
    %c0_4 = arith.constant 0 : index
    %c0_5 = arith.constant 0 : index
    %4 = vector.load %arg2[%c0_4, %c0_5] : memref<16x16xf32, #tpu.memory_space<vmem>>, vector<16x16xf32>
    %cst_6 = arith.constant dense<0.000000e+00> : vector<16x8x16xf32>
    %5 = tpu.matmul %3, %4, %cst_6 {dimension_numbers = #tpu.dot_dimension_numbers<[2], [1], [0, 1], [0], [0, 0, 0, 1, 1, 0], [], []>} : vector<16x8x16xf32>, vector<16x16xf32>, vector<16x8x16xf32> -> vector<16x8x16xf32>
    %6 = tpu.transpose %5, [0, 2, 1] : vector<16x8x16xf32> -> vector<16x16x8xf32>
    %c0_7 = arith.constant 0 : index
    %c0_8 = arith.constant 0 : index
    %c0_9 = arith.constant 0 : index
    %7 = vector.load %arg4[%c0_7, %c0_8, %c0_9] : memref<16x16x8xf32, #tpu.memory_space<vmem>>, vector<16x16x8xf32>
    tpu.vector_store %arg4[%c0_7, %c0_8, %c0_9], %6 {strides = array<i32>} : memref<16x16x8xf32, #tpu.memory_space<vmem>>, vector<16x16x8xf32>,
    return
  }
  func.func @transform_0(%arg0: i32) -> (i32, i32) {
    %c0_i32 = arith.constant 0 : i32
    %c0_i32_0 = arith.constant 0 : i32
    %c0_i32_1 = arith.constant 0 : i32
    return %c0_i32, %c0_i32_0 : i32, i32
  }
  func.func @transform_1(%arg0: i32) -> (i32, i32) {
    %c0_i32 = arith.constant 0 : i32
    %c0_i32_0 = arith.constant 0 : i32
    %c0_i32_1 = arith.constant 0 : i32
    return %c0_i32, %c0_i32_0 : i32, i32
  }
  func.func @transform_2(%arg0: i32) -> (i32, i32, i32) {
    %c0_i32 = arith.constant 0 : i32
    %c0_i32_0 = arith.constant 0 : i32
    %c0_i32_1 = arith.constant 0 : i32
    return %c0_i32, %c0_i32_0, %arg0 : i32, i32, i32
  }
  func.func @transform_3(%arg0: i32) -> (i32, i32, i32) {
    %c0_i32 = arith.constant 0 : i32
    %c0_i32_0 = arith.constant 0 : i32
    %c0_i32_1 = arith.constant 0 : i32
    return %c0_i32, %c0_i32_0, %arg0 : i32, i32, i32
  }
}

</mosaic_0001>

<llo_original>
// kernel: tpu_custom_call.1
$region0: #{tpu_custom_call.1}
  #allocation0 [shape = 'u32[]', space=smem, size = 0x4, offset = 0x4, fixed_abs, tag = 'smem constant byte address 0x4 - core index']
  #allocation1 [shape = 'u32[72,128]{1,0:T(1,128)}', space=vmem, size = 0x9000, scoped, tag = 'internal scratch']
  %s0 = inlined_call_operand.vmem [shape: f32[16,16], index: 0, kind: input, shape index: {}]
  %s1 = inlined_call_operand.vmem [shape: f32[16,16], index: 1, kind: input, shape index: {}]
  %s2 = inlined_call_operand.vmem [shape: f32[16,16,8], index: 2, kind: input, shape index: {}]
  %s3 = inlined_call_operand.vmem [shape: f32[16,16,8], index: 3, kind: output, shape index: {}]
  %s4 = sld [smem:[#allocation0]]
  $region22: #{tpu_custom_call.1} parent=0
    _
  %s6 = ssub.s32 1, %s4
  %s7 = scalar_select 0, %s6, %s4
  // Predicated region
  $region2: #{tpu_custom_call.1} parent=0 // pred_check
    _
  $region3: #{tpu_custom_call.1} parent=0 // pred_check_branch
    %9 = sbr.rel (0) target = $region5
  $region4: #{tpu_custom_call.1} parent=0 // pred_region
    _
  $region5: #{tpu_custom_call.1} parent=0 // pred_fallthru
    _
  // Predicated region
  $region6: #{tpu_custom_call.1} parent=0 // pred_check
    _
  $region7: #{tpu_custom_call.1} parent=0 // pred_check_branch
    %11 = sbr.rel (0) target = $region9
  $region8: #{tpu_custom_call.1} parent=0 // pred_region
    _
  $region9: #{tpu_custom_call.1} parent=0 // pred_fallthru
    _
  // Predicated region
  $region10: #{tpu_custom_call.1} parent=0 // pred_check
    _
  $region11: #{tpu_custom_call.1} parent=0 // pred_check_branch
    %13 = sbr.rel (0) target = $region13
  $region12: #{tpu_custom_call.1} parent=0 // pred_region
    _
  $region13: #{tpu_custom_call.1} parent=0 // pred_fallthru
    _
  %v14 = vld [vmem:[%s0] sm:$0xff]
  %v15 = vld [vmem:[%s0 + $0x8] sm:$0xff]
  %v16 = vld [vmem:[%s2] sm:$0xff]
  %v17 = vld [vmem:[%s2 + $0x8] sm:$0xff]
  %v18 = vld [vmem:[%s2 + $0x10] sm:$0xff]
  %v19 = vld [vmem:[%s2 + $0x18] sm:$0xff]
  %v20 = vld [vmem:[%s2 + $0x20] sm:$0xff]
  %v21 = vld [vmem:[%s2 + $0x28] sm:$0xff]
  %v22 = vld [vmem:[%s2 + $0x30] sm:$0xff]
  %v23 = vld [vmem:[%s2 + $0x38] sm:$0xff]
  %v24 = vld [vmem:[%s2 + $0x40] sm:$0xff]
  %v25 = vld [vmem:[%s2 + $0x48] sm:$0xff]
  %v26 = vld [vmem:[%s2 + $0x50] sm:$0xff]
  %v27 = vld [vmem:[%s2 + $0x58] sm:$0xff]
  %v28 = vld [vmem:[%s2 + $0x60] sm:$0xff]
  %v29 = vld [vmem:[%s2 + $0x68] sm:$0xff]
  %v30 = vld [vmem:[%s2 + $0x70] sm:$0xff]
  %v31 = vld [vmem:[%s2 + $0x78] sm:$0xff]
  %v32 = vld [vmem:[%s2 + $0x80] sm:$0xff]
  %v33 = vld [vmem:[%s2 + $0x88] sm:$0xff]
  %v34 = vld [vmem:[%s2 + $0x90] sm:$0xff]
  %v35 = vld [vmem:[%s2 + $0x98] sm:$0xff]
  %v36 = vld [vmem:[%s2 + $0xa0] sm:$0xff]
  %v37 = vld [vmem:[%s2 + $0xa8] sm:$0xff]
  %v38 = vld [vmem:[%s2 + $0xb0] sm:$0xff]
  %v39 = vld [vmem:[%s2 + $0xb8] sm:$0xff]
  %v40 = vld [vmem:[%s2 + $0xc0] sm:$0xff]
  %v41 = vld [vmem:[%s2 + $0xc8] sm:$0xff]
  %v42 = vld [vmem:[%s2 + $0xd0] sm:$0xff]
  %v43 = vld [vmem:[%s2 + $0xd8] sm:$0xff]
  %v44 = vld [vmem:[%s2 + $0xe0] sm:$0xff]
  %v45 = vld [vmem:[%s2 + $0xe8] sm:$0xff]
  %v46 = vld [vmem:[%s2 + $0xf0] sm:$0xff]
  %v47 = vld [vmem:[%s2 + $0xf8] sm:$0xff]
  %v48 = vrot.slane %v20, 4
  %vm49 = vcmask 1047556
  %v50 = vsel %vm49, %v48, %v16
  %v51 = vrot.slane %v16, 4
  %v52 = vsel %vm49, %v20, %v51
  %v54 = vunpack.c.l.s4 1983009808
  %v55 = vunpack.c.0.s8 %v54
  %v56 = vperm.slane %v50, %v55
  %v58 = vunpack.c.l.s4 1983009808
  %v59 = vunpack.c.0.s8 %v58
  %v60 = vperm.slane %v52, %v59
  %v61 = vrot.slane %v22, 4
  %v62 = vsel %vm49, %v61, %v18
  %v63 = vrot.slane %v18, 4
  %v64 = vsel %vm49, %v22, %v63
  %v66 = vunpack.c.l.s4 1983009808
  %v67 = vunpack.c.0.s8 %v66
  %v68 = vperm.slane %v62, %v67
  %v70 = vunpack.c.l.s4 1983009808
  %v71 = vunpack.c.0.s8 %v70
  %v72 = vperm.slane %v64, %v71
  %v73 = vrot.slane %v28, 4
  %v74 = vsel %vm49, %v73, %v24
  %v75 = vrot.slane %v24, 4
  %v76 = vsel %vm49, %v28, %v75
  %v78 = vunpack.c.l.s4 1983009808
  %v79 = vunpack.c.0.s8 %v78
  %v80 = vperm.slane %v74, %v79
  %v82 = vunpack.c.l.s4 1983009808
  %v83 = vunpack.c.0.s8 %v82
  %v84 = vperm.slane %v76, %v83
  %v85 = vrot.slane %v30, 4
  %v86 = vsel %vm49, %v85, %v26
  %v87 = vrot.slane %v26, 4
  %v88 = vsel %vm49, %v30, %v87
  %v90 = vunpack.c.l.s4 1983009808
  %v91 = vunpack.c.0.s8 %v90
  %v92 = vperm.slane %v86, %v91
  %v94 = vunpack.c.l.s4 1983009808
  %v95 = vunpack.c.0.s8 %v94
  %v96 = vperm.slane %v88, %v95
  %v97 = vrot.slane %v68, 4
  %v98 = vsel %vm49, %v97, %v56
  %v99 = vrot.slane %v56, 4
  %v100 = vsel %vm49, %v68, %v99
  %v102 = vunpack.c.l.s4 1934713408
  %v103 = vunpack.c.0.s8 %v102
  %v104 = vperm.slane %v98, %v103
  %v106 = vunpack.c.l.s4 1934713408
  %v107 = vunpack.c.0.s8 %v106
  %v108 = vperm.slane %v100, %v107
  %v109 = vrot.slane %v72, 4
  %v110 = vsel %vm49, %v109, %v60
  %v111 = vrot.slane %v60, 4
  %v112 = vsel %vm49, %v72, %v111
  %v114 = vunpack.c.l.s4 1934713408
  %v115 = vunpack.c.0.s8 %v114
  %v116 = vperm.slane %v110, %v115
  %v118 = vunpack.c.l.s4 1934713408
  %v119 = vunpack.c.0.s8 %v118
  %v120 = vperm.slane %v112, %v119
  %v121 = vrot.slane %v92, 4
  %v122 = vsel %vm49, %v121, %v80
  %v123 = vrot.slane %v80, 4
  %v124 = vsel %vm49, %v92, %v123
  %v126 = vunpack.c.l.s4 1934713408
  %v127 = vunpack.c.0.s8 %v126
  %v128 = vperm.slane %v122, %v127
  %v130 = vunpack.c.l.s4 1934713408
  %v131 = vunpack.c.0.s8 %v130
  %v132 = vperm.slane %v124, %v131
  %v133 = vrot.slane %v96, 4
  %v134 = vsel %vm49, %v133, %v84
  %v135 = vrot.slane %v84, 4
  %v136 = vsel %vm49, %v96, %v135
  %v138 = vunpack.c.l.s4 1934713408
  %v139 = vunpack.c.0.s8 %v138
  %v140 = vperm.slane %v134, %v139
  %v142 = vunpack.c.l.s4 1934713408
  %v143 = vunpack.c.0.s8 %v142
  %v144 = vperm.slane %v136, %v143
  %v145 = vrot.slane %v128, 4
  %v146 = vsel %vm49, %v145, %v104
  %v147 = vrot.slane %v104, 4
  %v148 = vsel %vm49, %v128, %v147
  %v149 = vrot.slane %v132, 4
  %v150 = vsel %vm49, %v149, %v108
  %v151 = vrot.slane %v108, 4
  %v152 = vsel %vm49, %v132, %v151
  %v153 = vrot.slane %v140, 4
  %v154 = vsel %vm49, %v153, %v116
  %v155 = vrot.slane %v116, 4
  %v156 = vsel %vm49, %v140, %v155
  %v157 = vrot.slane %v144, 4
  %v158 = vsel %vm49, %v157, %v120
  %v159 = vrot.slane %v120, 4
  %v160 = vsel %vm49, %v144, %v159
  %v161 = vrot.slane %v36, 4
  %v162 = vsel %vm49, %v161, %v32
  %v163 = vrot.slane %v32, 4
  %v164 = vsel %vm49, %v36, %v163
  %v166 = vunpack.c.l.s4 1983009808
  %v167 = vunpack.c.0.s8 %v166
  %v168 = vperm.slane %v162, %v167
  %v170 = vunpack.c.l.s4 1983009808
  %v171 = vunpack.c.0.s8 %v170
  %v172 = vperm.slane %v164, %v171
  %v173 = vrot.slane %v38, 4
  %v174 = vsel %vm49, %v173, %v34
  %v175 = vrot.slane %v34, 4
  %v176 = vsel %vm49, %v38, %v175
  %v178 = vunpack.c.l.s4 1983009808
  %v179 = vunpack.c.0.s8 %v178
  %v180 = vperm.slane %v174, %v179
  %v182 = vunpack.c.l.s4 1983009808
  %v183 = vunpack.c.0.s8 %v182
  %v184 = vperm.slane %v176, %v183
  %v185 = vrot.slane %v44, 4
  %v186 = vsel %vm49, %v185, %v40
  %v187 = vrot.slane %v40, 4
  %v188 = vsel %vm49, %v44, %v187
  %v190 = vunpack.c.l.s4 1983009808
  %v191 = vunpack.c.0.s8 %v190
  %v192 = vperm.slane %v186, %v191
  %v194 = vunpack.c.l.s4 1983009808
  %v195 = vunpack.c.0.s8 %v194
  %v196 = vperm.slane %v188, %v195
  %v197 = vrot.slane %v46, 4
  %v198 = vsel %vm49, %v197, %v42
  %v199 = vrot.slane %v42, 4
  %v200 = vsel %vm49, %v46, %v199
  %v202 = vunpack.c.l.s4 1983009808
  %v203 = vunpack.c.0.s8 %v202
  %v204 = vperm.slane %v198, %v203
  %v206 = vunpack.c.l.s4 1983009808
  %v207 = vunpack.c.0.s8 %v206
  %v208 = vperm.slane %v200, %v207
  %v209 = vrot.slane %v180, 4
  %v210 = vsel %vm49, %v209, %v168
  %v211 = vrot.slane %v168, 4
  %v212 = vsel %vm49, %v180, %v211
  %v214 = vunpack.c.l.s4 1934713408
  %v215 = vunpack.c.0.s8 %v214
  %v216 = vperm.slane %v210, %v215
  %v218 = vunpack.c.l.s4 1934713408
  %v219 = vunpack.c.0.s8 %v218
  %v220 = vperm.slane %v212, %v219
  %v221 = vrot.slane %v184, 4
  %v222 = vsel %vm49, %v221, %v172
  %v223 = vrot.slane %v172, 4
  %v224 = vsel %vm49, %v184, %v223
  %v226 = vunpack.c.l.s4 1934713408
  %v227 = vunpack.c.0.s8 %v226
  %v228 = vperm.slane %v222, %v227
  %v230 = vunpack.c.l.s4 1934713408
  %v231 = vunpack.c.0.s8 %v230
  %v232 = vperm.slane %v224, %v231
  %v233 = vrot.slane %v204, 4
  %v234 = vsel %vm49, %v233, %v192
  %v235 = vrot.slane %v192, 4
  %v236 = vsel %vm49, %v204, %v235
  %v238 = vunpack.c.l.s4 1934713408
  %v239 = vunpack.c.0.s8 %v238
  %v240 = vperm.slane %v234, %v239
  %v242 = vunpack.c.l.s4 1934713408
  %v243 = vunpack.c.0.s8 %v242
  %v244 = vperm.slane %v236, %v243
  %v245 = vrot.slane %v208, 4
  %v246 = vsel %vm49, %v245, %v196
  %v247 = vrot.slane %v196, 4
  %v248 = vsel %vm49, %v208, %v247
  %v250 = vunpack.c.l.s4 1934713408
  %v251 = vunpack.c.0.s8 %v250
  %v252 = vperm.slane %v246, %v251
  %v254 = vunpack.c.l.s4 1934713408
  %v255 = vunpack.c.0.s8 %v254
  %v256 = vperm.slane %v248, %v255
  %v257 = vrot.slane %v240, 4
  %v258 = vsel %vm49, %v257, %v216
  %v259 = vrot.slane %v216, 4
  %v260 = vsel %vm49, %v240, %v259
  %v261 = vrot.slane %v244, 4
  %v262 = vsel %vm49, %v261, %v220
  %v263 = vrot.slane %v220, 4
  %v264 = vsel %vm49, %v244, %v263
  %v265 = vrot.slane %v252, 4
  %v266 = vsel %vm49, %v265, %v228
  %v267 = vrot.slane %v228, 4
  %v268 = vsel %vm49, %v252, %v267
  %v269 = vrot.slane %v256, 4
  %v270 = vsel %vm49, %v269, %v232
  %v271 = vrot.slane %v232, 4
  %v272 = vsel %vm49, %v256, %v271
  %v273 = vrot.slane %v21, 4
  %v274 = vsel %vm49, %v273, %v17
  %v275 = vrot.slane %v17, 4
  %v276 = vsel %vm49, %v21, %v275
  %v278 = vunpack.c.l.s4 1983009808
  %v279 = vunpack.c.0.s8 %v278
  %v280 = vperm.slane %v274, %v279
  %v282 = vunpack.c.l.s4 1983009808
  %v283 = vunpack.c.0.s8 %v282
  %v284 = vperm.slane %v276, %v283
  %v285 = vrot.slane %v23, 4
  %v286 = vsel %vm49, %v285, %v19
  %v287 = vrot.slane %v19, 4
  %v288 = vsel %vm49, %v23, %v287
  %v290 = vunpack.c.l.s4 1983009808
  %v291 = vunpack.c.0.s8 %v290
  %v292 = vperm.slane %v286, %v291
  %v294 = vunpack.c.l.s4 1983009808
  %v295 = vunpack.c.0.s8 %v294
  %v296 = vperm.slane %v288, %v295
  %v297 = vrot.slane %v29, 4
  %v298 = vsel %vm49, %v297, %v25
  %v299 = vrot.slane %v25, 4
  %v300 = vsel %vm49, %v29, %v299
  %v302 = vunpack.c.l.s4 1983009808
  %v303 = vunpack.c.0.s8 %v302
  %v304 = vperm.slane %v298, %v303
  %v306 = vunpack.c.l.s4 1983009808
  %v307 = vunpack.c.0.s8 %v306
  %v308 = vperm.slane %v300, %v307
  %v309 = vrot.slane %v31, 4
  %v310 = vsel %vm49, %v309, %v27
  %v311 = vrot.slane %v27, 4
  %v312 = vsel %vm49, %v31, %v311
  %v314 = vunpack.c.l.s4 1983009808
  %v315 = vunpack.c.0.s8 %v314
  %v316 = vperm.slane %v310, %v315
  %v318 = vunpack.c.l.s4 1983009808
  %v319 = vunpack.c.0.s8 %v318
  %v320 = vperm.slane %v312, %v319
  %v321 = vrot.slane %v292, 4
  %v322 = vsel %vm49, %v321, %v280
  %v323 = vrot.slane %v280, 4
  %v324 = vsel %vm49, %v292, %v323
  %v326 = vunpack.c.l.s4 1934713408
  %v327 = vunpack.c.0.s8 %v326
  %v328 = vperm.slane %v322, %v327
  %v330 = vunpack.c.l.s4 1934713408
  %v331 = vunpack.c.0.s8 %v330
  %v332 = vperm.slane %v324, %v331
  %v333 = vrot.slane %v296, 4
  %v334 = vsel %vm49, %v333, %v284
  %v335 = vrot.slane %v284, 4
  %v336 = vsel %vm49, %v296, %v335
  %v338 = vunpack.c.l.s4 1934713408
  %v339 = vunpack.c.0.s8 %v338
  %v340 = vperm.slane %v334, %v339
  %v342 = vunpack.c.l.s4 1934713408
  %v343 = vunpack.c.0.s8 %v342
  %v344 = vperm.slane %v336, %v343
  %v345 = vrot.slane %v316, 4
  %v346 = vsel %vm49, %v345, %v304
  %v347 = vrot.slane %v304, 4
  %v348 = vsel %vm49, %v316, %v347
  %v350 = vunpack.c.l.s4 1934713408
  %v351 = vunpack.c.0.s8 %v350
  %v352 = vperm.slane %v346, %v351
  %v354 = vunpack.c.l.s4 1934713408
  %v355 = vunpack.c.0.s8 %v354
  %v356 = vperm.slane %v348, %v355
  %v357 = vrot.slane %v320, 4
  %v358 = vsel %vm49, %v357, %v308
  %v359 = vrot.slane %v308, 4
  %v360 = vsel %vm49, %v320, %v359
  %v362 = vunpack.c.l.s4 1934713408
  %v363 = vunpack.c.0.s8 %v362
  %v364 = vperm.slane %v358, %v363
  %v366 = vunpack.c.l.s4 1934713408
  %v367 = vunpack.c.0.s8 %v366
  %v368 = vperm.slane %v360, %v367
  %v369 = vrot.slane %v352, 4
  %v370 = vsel %vm49, %v369, %v328
  %v371 = vrot.slane %v328, 4
  %v372 = vsel %vm49, %v352, %v371
  %v373 = vrot.slane %v356, 4
  %v374 = vsel %vm49, %v373, %v332
  %v375 = vrot.slane %v332, 4
  %v376 = vsel %vm49, %v356, %v375
  %v377 = vrot.slane %v364, 4
  %v378 = vsel %vm49, %v377, %v340
  %v379 = vrot.slane %v340, 4
  %v380 = vsel %vm49, %v364, %v379
  %v381 = vrot.slane %v368, 4
  %v382 = vsel %vm49, %v381, %v344
  %v383 = vrot.slane %v344, 4
  %v384 = vsel %vm49, %v368, %v383
  %v385 = vrot.slane %v37, 4
  %v386 = vsel %vm49, %v385, %v33
  %v387 = vrot.slane %v33, 4
  %v388 = vsel %vm49, %v37, %v387
  %v390 = vunpack.c.l.s4 1983009808
  %v391 = vunpack.c.0.s8 %v390
  %v392 = vperm.slane %v386, %v391
  %v394 = vunpack.c.l.s4 1983009808
  %v395 = vunpack.c.0.s8 %v394
  %v396 = vperm.slane %v388, %v395
  %v397 = vrot.slane %v39, 4
  %v398 = vsel %vm49, %v397, %v35
  %v399 = vrot.slane %v35, 4
  %v400 = vsel %vm49, %v39, %v399
  %v402 = vunpack.c.l.s4 1983009808
  %v403 = vunpack.c.0.s8 %v402
  %v404 = vperm.slane %v398, %v403
  %v406 = vunpack.c.l.s4 1983009808
  %v407 = vunpack.c.0.s8 %v406
  %v408 = vperm.slane %v400, %v407
  %v409 = vrot.slane %v45, 4
  %v410 = vsel %vm49, %v409, %v41
  %v411 = vrot.slane %v41, 4
  %v412 = vsel %vm49, %v45, %v411
  %v414 = vunpack.c.l.s4 1983009808
  %v415 = vunpack.c.0.s8 %v414
  %v416 = vperm.slane %v410, %v415
  %v418 = vunpack.c.l.s4 1983009808
  %v419 = vunpack.c.0.s8 %v418
  %v420 = vperm.slane %v412, %v419
  %v421 = vrot.slane %v47, 4
  %v422 = vsel %vm49, %v421, %v43
  %v423 = vrot.slane %v43, 4
  %v424 = vsel %vm49, %v47, %v423
  %v426 = vunpack.c.l.s4 1983009808
  %v427 = vunpack.c.0.s8 %v426
  %v428 = vperm.slane %v422, %v427
  %v430 = vunpack.c.l.s4 1983009808
  %v431 = vunpack.c.0.s8 %v430
  %v432 = vperm.slane %v424, %v431
  %v433 = vrot.slane %v404, 4
  %v434 = vsel %vm49, %v433, %v392
  %v435 = vrot.slane %v392, 4
  %v436 = vsel %vm49, %v404, %v435
  %v438 = vunpack.c.l.s4 1934713408
  %v439 = vunpack.c.0.s8 %v438
  %v440 = vperm.slane %v434, %v439
  %v442 = vunpack.c.l.s4 1934713408
  %v443 = vunpack.c.0.s8 %v442
  %v444 = vperm.slane %v436, %v443
  %v445 = vrot.slane %v408, 4
  %v446 = vsel %vm49, %v445, %v396
  %v447 = vrot.slane %v396, 4
  %v448 = vsel %vm49, %v408, %v447
  %v450 = vunpack.c.l.s4 1934713408
  %v451 = vunpack.c.0.s8 %v450
  %v452 = vperm.slane %v446, %v451
  %v454 = vunpack.c.l.s4 1934713408
  %v455 = vunpack.c.0.s8 %v454
  %v456 = vperm.slane %v448, %v455
  %v457 = vrot.slane %v428, 4
  %v458 = vsel %vm49, %v457, %v416
  %v459 = vrot.slane %v416, 4
  %v460 = vsel %vm49, %v428, %v459
  %v462 = vunpack.c.l.s4 1934713408
  %v463 = vunpack.c.0.s8 %v462
  %v464 = vperm.slane %v458, %v463
  %v466 = vunpack.c.l.s4 1934713408
  %v467 = vunpack.c.0.s8 %v466
  %v468 = vperm.slane %v460, %v467
  %v469 = vrot.slane %v432, 4
  %v470 = vsel %vm49, %v469, %v420
  %v471 = vrot.slane %v420, 4
  %v472 = vsel %vm49, %v432, %v471
  %v474 = vunpack.c.l.s4 1934713408
  %v475 = vunpack.c.0.s8 %v474
  %v476 = vperm.slane %v470, %v475
  %v478 = vunpack.c.l.s4 1934713408
  %v479 = vunpack.c.0.s8 %v478
  %v480 = vperm.slane %v472, %v479
  %v481 = vrot.slane %v464, 4
  %v482 = vsel %vm49, %v481, %v440
  %v483 = vrot.slane %v440, 4
  %v484 = vsel %vm49, %v464, %v483
  %v485 = vrot.slane %v468, 4
  %v486 = vsel %vm49, %v485, %v444
  %v487 = vrot.slane %v444, 4
  %v488 = vsel %vm49, %v468, %v487
  %v489 = vrot.slane %v476, 4
  %v490 = vsel %vm49, %v489, %v452
  %v491 = vrot.slane %v452, 4
  %v492 = vsel %vm49, %v476, %v491
  %v493 = vrot.slane %v480, 4
  %v494 = vsel %vm49, %v493, %v456
  %v495 = vrot.slane %v456, 4
  %v496 = vsel %vm49, %v480, %v495
  %499 = vrot.lane.b32.xlu0 %v148, 8
  %v500 = vpop.permute.xlu0 %499
  %501 = vrot.lane.b32.xlu0 %v260, 8
  %v502 = vpop.permute.xlu0 %501
  %507 = vrot.lane.b32.xlu0 %v150, 16
  %v508 = vpop.permute.xlu0 %507
  %509 = vrot.lane.b32.xlu0 %v262, 16
  %v510 = vpop.permute.xlu0 %509
  %515 = vrot.lane.b32.xlu0 %v152, 24
  %v516 = vpop.permute.xlu0 %515
  %517 = vrot.lane.b32.xlu0 %v264, 24
  %v518 = vpop.permute.xlu0 %517
  %523 = vrot.lane.b32.xlu0 %v154, 32
  %v524 = vpop.permute.xlu0 %523
  %525 = vrot.lane.b32.xlu0 %v266, 32
  %v526 = vpop.permute.xlu0 %525
  %531 = vrot.lane.b32.xlu0 %v156, 40
  %v532 = vpop.permute.xlu0 %531
  %533 = vrot.lane.b32.xlu0 %v268, 40
  %v534 = vpop.permute.xlu0 %533
  %539 = vrot.lane.b32.xlu0 %v158, 48
  %v540 = vpop.permute.xlu0 %539
  %541 = vrot.lane.b32.xlu0 %v270, 48
  %v542 = vpop.permute.xlu0 %541
  %547 = vrot.lane.b32.xlu0 %v160, 56
  %v548 = vpop.permute.xlu0 %547
  %549 = vrot.lane.b32.xlu0 %v272, 56
  %v550 = vpop.permute.xlu0 %549
  %555 = vrot.lane.b32.xlu0 %v370, 64
  %v556 = vpop.permute.xlu0 %555
  %557 = vrot.lane.b32.xlu0 %v482, 64
  %v558 = vpop.permute.xlu0 %557
  %563 = vrot.lane.b32.xlu0 %v372, 72
  %v564 = vpop.permute.xlu0 %563
  %565 = vrot.lane.b32.xlu0 %v484, 72
  %v566 = vpop.permute.xlu0 %565
  %571 = vrot.lane.b32.xlu0 %v374, 80
  %v572 = vpop.permute.xlu0 %571
  %573 = vrot.lane.b32.xlu0 %v486, 80
  %v574 = vpop.permute.xlu0 %573
  %579 = vrot.lane.b32.xlu0 %v376, 88
  %v580 = vpop.permute.xlu0 %579
  %581 = vrot.lane.b32.xlu0 %v488, 88
  %v582 = vpop.permute.xlu0 %581
  %587 = vrot.lane.b32.xlu0 %v378, 96
  %v588 = vpop.permute.xlu0 %587
  %589 = vrot.lane.b32.xlu0 %v490, 96
  %v590 = vpop.permute.xlu0 %589
  %595 = vrot.lane.b32.xlu0 %v380, 104
  %v596 = vpop.permute.xlu0 %595
  %597 = vrot.lane.b32.xlu0 %v492, 104
  %v598 = vpop.permute.xlu0 %597
  %603 = vrot.lane.b32.xlu0 %v382, 112
  %v604 = vpop.permute.xlu0 %603
  %605 = vrot.lane.b32.xlu0 %v494, 112
  %v606 = vpop.permute.xlu0 %605
  %611 = vrot.lane.b32.xlu0 %v384, 120
  %v612 = vpop.permute.xlu0 %611
  %613 = vrot.lane.b32.xlu0 %v496, 120
  %v614 = vpop.permute.xlu0 %613
  %vm617 = vcmask 64512
  %v618 = vsel %vm617, %v146, %v500
  %v619 = vsel %vm617, %v258, %v502
  %vm620 = vcmask 130048
  %v621 = vsel %vm620, %v618, %v508
  %v622 = vsel %vm620, %v619, %v510
  %vm623 = vcmask 195584
  %v624 = vsel %vm623, %v621, %v516
  %v625 = vsel %vm623, %v622, %v518
  %vm626 = vcmask 261120
  %v627 = vsel %vm626, %v624, %v524
  %v628 = vsel %vm626, %v625, %v526
  %vm629 = vcmask 326656
  %v630 = vsel %vm629, %v627, %v532
  %v631 = vsel %vm629, %v628, %v534
  %vm632 = vcmask 392192
  %v633 = vsel %vm632, %v630, %v540
  %v634 = vsel %vm632, %v631, %v542
  %vm635 = vcmask 457728
  %v636 = vsel %vm635, %v633, %v548
  %v637 = vsel %vm635, %v634, %v550
  %vm638 = vcmask 523264
  %v639 = vsel %vm638, %v636, %v556
  %v640 = vsel %vm638, %v637, %v558
  %vm641 = vcmask 588800
  %v642 = vsel %vm641, %v639, %v564
  %v643 = vsel %vm641, %v640, %v566
  %vm644 = vcmask 654336
  %v645 = vsel %vm644, %v642, %v572
  %v646 = vsel %vm644, %v643, %v574
  %vm647 = vcmask 719872
  %v648 = vsel %vm647, %v645, %v580
  %v649 = vsel %vm647, %v646, %v582
  %vm650 = vcmask 785408
  %v651 = vsel %vm650, %v648, %v588
  %v652 = vsel %vm650, %v649, %v590
  %vm653 = vcmask 850944
  %v654 = vsel %vm653, %v651, %v596
  %v655 = vsel %vm653, %v652, %v598
  %vm656 = vcmask 916480
  %v657 = vsel %vm656, %v654, %v604
  %v658 = vsel %vm656, %v655, %v606
  %vm659 = vcmask 982016
  %v660 = vsel %vm659, %v657, %v612
  %v661 = vsel %vm659, %v658, %v614
  %v662 = vsel %vm49, 0.0, 0.0
  %v663 = vsel %vm49, 0.0, 0.0
  %v665 = vunpack.c.l.s4 1983009808
  %v666 = vunpack.c.0.s8 %v665
  %v667 = vperm.slane %v662, %v666
  %v669 = vunpack.c.l.s4 1983009808
  %v670 = vunpack.c.0.s8 %v669
  %v671 = vperm.slane %v663, %v670
  %v672 = vrot.slane %v667, 4
  %v673 = vsel %vm49, %v672, %v667
  %v674 = vsel %vm49, %v667, %v672
  %v676 = vunpack.c.l.s4 1934713408
  %v677 = vunpack.c.0.s8 %v676
  %v678 = vperm.slane %v673, %v677
  %v680 = vunpack.c.l.s4 1934713408
  %v681 = vunpack.c.0.s8 %v680
  %v682 = vperm.slane %v674, %v681
  %v683 = vrot.slane %v671, 4
  %v684 = vsel %vm49, %v683, %v671
  %v685 = vsel %vm49, %v671, %v683
  %v687 = vunpack.c.l.s4 1934713408
  %v688 = vunpack.c.0.s8 %v687
  %v689 = vperm.slane %v684, %v688
  %v691 = vunpack.c.l.s4 1934713408
  %v692 = vunpack.c.0.s8 %v691
  %v693 = vperm.slane %v685, %v692
  %v694 = vrot.slane %v678, 4
  %v695 = vsel %vm49, %v694, %v678
  %v696 = vsel %vm49, %v678, %v694
  %v697 = vrot.slane %v682, 4
  %v698 = vsel %vm49, %v697, %v682
  %v699 = vsel %vm49, %v682, %v697
  %v700 = vrot.slane %v689, 4
  %v701 = vsel %vm49, %v700, %v689
  %v702 = vsel %vm49, %v689, %v700
  %v703 = vrot.slane %v693, 4
  %v704 = vsel %vm49, %v703, %v693
  %v705 = vsel %vm49, %v693, %v703
  %707 = vrot.lane.b32.xlu0 %v696, 8
  %v708 = vpop.permute.xlu0 %707
  %711 = vrot.lane.b32.xlu0 %v698, 16
  %v712 = vpop.permute.xlu0 %711
  %715 = vrot.lane.b32.xlu0 %v699, 24
  %v716 = vpop.permute.xlu0 %715
  %719 = vrot.lane.b32.xlu0 %v701, 32
  %v720 = vpop.permute.xlu0 %719
  %723 = vrot.lane.b32.xlu0 %v702, 40
  %v724 = vpop.permute.xlu0 %723
  %727 = vrot.lane.b32.xlu0 %v704, 48
  %v728 = vpop.permute.xlu0 %727
  %731 = vrot.lane.b32.xlu0 %v705, 56
  %v732 = vpop.permute.xlu0 %731
  %735 = vrot.lane.b32.xlu0 %v695, 64
  %v736 = vpop.permute.xlu0 %735
  %738 = vrot.lane.b32.xlu0 %v696, 72
  %v739 = vpop.permute.xlu0 %738
  %741 = vrot.lane.b32.xlu0 %v698, 80
  %v742 = vpop.permute.xlu0 %741
  %744 = vrot.lane.b32.xlu0 %v699, 88
  %v745 = vpop.permute.xlu0 %744
  %747 = vrot.lane.b32.xlu0 %v701, 96
  %v748 = vpop.permute.xlu0 %747
  %750 = vrot.lane.b32.xlu0 %v702, 104
  %v751 = vpop.permute.xlu0 %750
  %753 = vrot.lane.b32.xlu0 %v704, 112
  %v754 = vpop.permute.xlu0 %753
  %756 = vrot.lane.b32.xlu0 %v705, 120
  %v757 = vpop.permute.xlu0 %756
  %v759 = vsel %vm617, %v695, %v708
  %v760 = vsel %vm620, %v759, %v712
  %v761 = vsel %vm623, %v760, %v716
  %v762 = vsel %vm626, %v761, %v720
  %v763 = vsel %vm629, %v762, %v724
  %v764 = vsel %vm632, %v763, %v728
  %v765 = vsel %vm635, %v764, %v732
  %v766 = vsel %vm638, %v765, %v736
  %v767 = vsel %vm641, %v766, %v739
  %v768 = vsel %vm644, %v767, %v742
  %v769 = vsel %vm647, %v768, %v745
  %v770 = vsel %vm650, %v769, %v748
  %v771 = vsel %vm653, %v770, %v751
  %v772 = vsel %vm656, %v771, %v754
  %v773 = vsel %vm659, %v772, %v757
  %v775 = vsel %vm620, %v14, 0
  %v778 = vsel %vm620, %v15, 0
  %780 = vmatpush.msra.mxu0 0.0
  %781 = vmatpush.msra.mxu0 0.0
  %782 = vmatpush.msra.mxu0 0.0
  %783 = vmatpush.msra.mxu0 0.0
  %784 = vmatpush.msra.mxu0 0.0
  %785 = vmatpush.msra.mxu0 0.0
  %786 = vmatpush.msra.mxu0 0.0
  %787 = vmatpush.msra.mxu0 0.0
  %788 = vmatpush.msra.mxu0 0.0
  %789 = vmatpush.msra.mxu0 0.0
  %790 = vmatpush.msra.mxu0 0.0
  %791 = vmatpush.msra.mxu0 0.0
  %792 = vmatpush.msra.mxu0 0.0
  %793 = vmatpush.msra.mxu0 0.0
  %794 = vmatpush.msra.mxu0 %v661
  %795 = vmatpush.msra.mxu0 %v660
  %796 = vmatmul.f32.gmra.mxu0 %v775
  %v797 = vpop.f32.mrf.mxu0
  %v798 = vadd.f32 %v773, %v797
  %799 = vmatmul.f32.gmra.mxu0 %v778
  %v800 = vpop.f32.mrf.mxu0
  %v801 = vadd.f32 %v773, %v800
  %802 = vdwg.mxu0
  %805 = vrot.lane.b32.xlu0 %v798, 120
  %v806 = vpop.permute.xlu0 %805
  %807 = vrot.lane.b32.xlu0 %v801, 120
  %v808 = vpop.permute.xlu0 %807
  %811 = vrot.lane.b32.xlu0 %v798, 112
  %v812 = vpop.permute.xlu0 %811
  %813 = vrot.lane.b32.xlu0 %v801, 112
  %v814 = vpop.permute.xlu0 %813
  %817 = vrot.lane.b32.xlu0 %v798, 104
  %v818 = vpop.permute.xlu0 %817
  %819 = vrot.lane.b32.xlu0 %v801, 104
  %v820 = vpop.permute.xlu0 %819
  %823 = vrot.lane.b32.xlu0 %v798, 96
  %v824 = vpop.permute.xlu0 %823
  %825 = vrot.lane.b32.xlu0 %v801, 96
  %v826 = vpop.permute.xlu0 %825
  %829 = vrot.lane.b32.xlu0 %v798, 88
  %v830 = vpop.permute.xlu0 %829
  %831 = vrot.lane.b32.xlu0 %v801, 88
  %v832 = vpop.permute.xlu0 %831
  %835 = vrot.lane.b32.xlu0 %v798, 80
  %v836 = vpop.permute.xlu0 %835
  %837 = vrot.lane.b32.xlu0 %v801, 80
  %v838 = vpop.permute.xlu0 %837
  %841 = vrot.lane.b32.xlu0 %v798, 72
  %v842 = vpop.permute.xlu0 %841
  %843 = vrot.lane.b32.xlu0 %v801, 72
  %v844 = vpop.permute.xlu0 %843
  %847 = vrot.lane.b32.xlu0 %v798, 64
  %v848 = vpop.permute.xlu0 %847
  %849 = vrot.lane.b32.xlu0 %v801, 64
  %v850 = vpop.permute.xlu0 %849
  %853 = vrot.lane.b32.xlu0 %v798, 56
  %v854 = vpop.permute.xlu0 %853
  %855 = vrot.lane.b32.xlu0 %v801, 56
  %v856 = vpop.permute.xlu0 %855
  %859 = vrot.lane.b32.xlu0 %v798, 48
  %v860 = vpop.permute.xlu0 %859
  %861 = vrot.lane.b32.xlu0 %v801, 48
  %v862 = vpop.permute.xlu0 %861
  %865 = vrot.lane.b32.xlu0 %v798, 40
  %v866 = vpop.permute.xlu0 %865
  %867 = vrot.lane.b32.xlu0 %v801, 40
  %v868 = vpop.permute.xlu0 %867
  %871 = vrot.lane.b32.xlu0 %v798, 32
  %v872 = vpop.permute.xlu0 %871
  %873 = vrot.lane.b32.xlu0 %v801, 32
  %v874 = vpop.permute.xlu0 %873
  %877 = vrot.lane.b32.xlu0 %v798, 24
  %v878 = vpop.permute.xlu0 %877
  %879 = vrot.lane.b32.xlu0 %v801, 24
  %v880 = vpop.permute.xlu0 %879
  %883 = vrot.lane.b32.xlu0 %v798, 16
  %v884 = vpop.permute.xlu0 %883
  %885 = vrot.lane.b32.xlu0 %v801, 16
  %v886 = vpop.permute.xlu0 %885
  %889 = vrot.lane.b32.xlu0 %v798, 8
  %v890 = vpop.permute.xlu0 %889
  %891 = vrot.lane.b32.xlu0 %v801, 8
  %v892 = vpop.permute.xlu0 %891
  %v895 = vrot.slane %v812, 4
  %v896 = vsel %vm49, %v895, %v798
  %v897 = vrot.slane %v798, 4
  %v898 = vsel %vm49, %v812, %v897
  %v900 = vunpack.c.l.s4 1983009808
  %v901 = vunpack.c.0.s8 %v900
  %v902 = vperm.slane %v896, %v901
  %v904 = vunpack.c.l.s4 1983009808
  %v905 = vunpack.c.0.s8 %v904
  %v906 = vperm.slane %v898, %v905
  %v907 = vrot.slane %v818, 4
  %v908 = vsel %vm49, %v907, %v806
  %v909 = vrot.slane %v806, 4
  %v910 = vsel %vm49, %v818, %v909
  %v912 = vunpack.c.l.s4 1983009808
  %v913 = vunpack.c.0.s8 %v912
  %v914 = vperm.slane %v908, %v913
  %v916 = vunpack.c.l.s4 1983009808
  %v917 = vunpack.c.0.s8 %v916
  %v918 = vperm.slane %v910, %v917
  %v919 = vrot.slane %v836, 4
  %v920 = vsel %vm49, %v919, %v824
  %v921 = vrot.slane %v824, 4
  %v922 = vsel %vm49, %v836, %v921
  %v924 = vunpack.c.l.s4 1983009808
  %v925 = vunpack.c.0.s8 %v924
  %v926 = vperm.slane %v920, %v925
  %v928 = vunpack.c.l.s4 1983009808
  %v929 = vunpack.c.0.s8 %v928
  %v930 = vperm.slane %v922, %v929
  %v931 = vrot.slane %v842, 4
  %v932 = vsel %vm49, %v931, %v830
  %v933 = vrot.slane %v830, 4
  %v934 = vsel %vm49, %v842, %v933
  %v936 = vunpack.c.l.s4 1983009808
  %v937 = vunpack.c.0.s8 %v936
  %v938 = vperm.slane %v932, %v937
  %v940 = vunpack.c.l.s4 1983009808
  %v941 = vunpack.c.0.s8 %v940
  %v942 = vperm.slane %v934, %v941
  %v943 = vrot.slane %v914, 4
  %v944 = vsel %vm49, %v943, %v902
  %v945 = vrot.slane %v902, 4
  %v946 = vsel %vm49, %v914, %v945
  %v948 = vunpack.c.l.s4 1934713408
  %v949 = vunpack.c.0.s8 %v948
  %v950 = vperm.slane %v944, %v949
  %v952 = vunpack.c.l.s4 1934713408
  %v953 = vunpack.c.0.s8 %v952
  %v954 = vperm.slane %v946, %v953
  %v955 = vrot.slane %v918, 4
  %v956 = vsel %vm49, %v955, %v906
  %v957 = vrot.slane %v906, 4
  %v958 = vsel %vm49, %v918, %v957
  %v960 = vunpack.c.l.s4 1934713408
  %v961 = vunpack.c.0.s8 %v960
  %v962 = vperm.slane %v956, %v961
  %v964 = vunpack.c.l.s4 1934713408
  %v965 = vunpack.c.0.s8 %v964
  %v966 = vperm.slane %v958, %v965
  %v967 = vrot.slane %v938, 4
  %v968 = vsel %vm49, %v967, %v926
  %v969 = vrot.slane %v926, 4
  %v970 = vsel %vm49, %v938, %v969
  %v972 = vunpack.c.l.s4 1934713408
  %v973 = vunpack.c.0.s8 %v972
  %v974 = vperm.slane %v968, %v973
  %v976 = vunpack.c.l.s4 1934713408
  %v977 = vunpack.c.0.s8 %v976
  %v978 = vperm.slane %v970, %v977
  %v979 = vrot.slane %v942, 4
  %v980 = vsel %vm49, %v979, %v930
  %v981 = vrot.slane %v930, 4
  %v982 = vsel %vm49, %v942, %v981
  %v984 = vunpack.c.l.s4 1934713408
  %v985 = vunpack.c.0.s8 %v984
  %v986 = vperm.slane %v980, %v985
  %v988 = vunpack.c.l.s4 1934713408
  %v989 = vunpack.c.0.s8 %v988
  %v990 = vperm.slane %v982, %v989
  %v991 = vrot.slane %v974, 4
  %v992 = vsel %vm49, %v991, %v950
  %v993 = vrot.slane %v950, 4
  %v994 = vsel %vm49, %v974, %v993
  %v995 = vrot.slane %v978, 4
  %v996 = vsel %vm49, %v995, %v954
  %v997 = vrot.slane %v954, 4
  %v998 = vsel %vm49, %v978, %v997
  %v999 = vrot.slane %v986, 4
  %v1000 = vsel %vm49, %v999, %v962
  %v1001 = vrot.slane %v962, 4
  %v1002 = vsel %vm49, %v986, %v1001
  %v1003 = vrot.slane %v990, 4
  %v1004 = vsel %vm49, %v1003, %v966
  %v1005 = vrot.slane %v966, 4
  %v1006 = vsel %vm49, %v990, %v1005
  %v1007 = vrot.slane %v860, 4
  %v1008 = vsel %vm49, %v1007, %v848
  %v1009 = vrot.slane %v848, 4
  %v1010 = vsel %vm49, %v860, %v1009
  %v1012 = vunpack.c.l.s4 1983009808
  %v1013 = vunpack.c.0.s8 %v1012
  %v1014 = vperm.slane %v1008, %v1013
  %v1016 = vunpack.c.l.s4 1983009808
  %v1017 = vunpack.c.0.s8 %v1016
  %v1018 = vperm.slane %v1010, %v1017
  %v1019 = vrot.slane %v866, 4
  %v1020 = vsel %vm49, %v1019, %v854
  %v1021 = vrot.slane %v854, 4
  %v1022 = vsel %vm49, %v866, %v1021
  %v1024 = vunpack.c.l.s4 1983009808
  %v1025 = vunpack.c.0.s8 %v1024
  %v1026 = vperm.slane %v1020, %v1025
  %v1028 = vunpack.c.l.s4 1983009808
  %v1029 = vunpack.c.0.s8 %v1028
  %v1030 = vperm.slane %v1022, %v1029
  %v1031 = vrot.slane %v884, 4
  %v1032 = vsel %vm49, %v1031, %v872
  %v1033 = vrot.slane %v872, 4
  %v1034 = vsel %vm49, %v884, %v1033
  %v1036 = vunpack.c.l.s4 1983009808
  %v1037 = vunpack.c.0.s8 %v1036
  %v1038 = vperm.slane %v1032, %v1037
  %v1040 = vunpack.c.l.s4 1983009808
  %v1041 = vunpack.c.0.s8 %v1040
  %v1042 = vperm.slane %v1034, %v1041
  %v1043 = vrot.slane %v890, 4
  %v1044 = vsel %vm49, %v1043, %v878
  %v1045 = vrot.slane %v878, 4
  %v1046 = vsel %vm49, %v890, %v1045
  %v1048 = vunpack.c.l.s4 1983009808
  %v1049 = vunpack.c.0.s8 %v1048
  %v1050 = vperm.slane %v1044, %v1049
  %v1052 = vunpack.c.l.s4 1983009808
  %v1053 = vunpack.c.0.s8 %v1052
  %v1054 = vperm.slane %v1046, %v1053
  %v1055 = vrot.slane %v1026, 4
  %v1056 = vsel %vm49, %v1055, %v1014
  %v1057 = vrot.slane %v1014, 4
  %v1058 = vsel %vm49, %v1026, %v1057
  %v1060 = vunpack.c.l.s4 1934713408
  %v1061 = vunpack.c.0.s8 %v1060
  %v1062 = vperm.slane %v1056, %v1061
  %v1064 = vunpack.c.l.s4 1934713408
  %v1065 = vunpack.c.0.s8 %v1064
  %v1066 = vperm.slane %v1058, %v1065
  %v1067 = vrot.slane %v1030, 4
  %v1068 = vsel %vm49, %v1067, %v1018
  %v1069 = vrot.slane %v1018, 4
  %v1070 = vsel %vm49, %v1030, %v1069
  %v1072 = vunpack.c.l.s4 1934713408
  %v1073 = vunpack.c.0.s8 %v1072
  %v1074 = vperm.slane %v1068, %v1073
  %v1076 = vunpack.c.l.s4 1934713408
  %v1077 = vunpack.c.0.s8 %v1076
  %v1078 = vperm.slane %v1070, %v1077
  %v1079 = vrot.slane %v1050, 4
  %v1080 = vsel %vm49, %v1079, %v1038
  %v1081 = vrot.slane %v1038, 4
  %v1082 = vsel %vm49, %v1050, %v1081
  %v1084 = vunpack.c.l.s4 1934713408
  %v1085 = vunpack.c.0.s8 %v1084
  %v1086 = vperm.slane %v1080, %v1085
  %v1088 = vunpack.c.l.s4 1934713408
  %v1089 = vunpack.c.0.s8 %v1088
  %v1090 = vperm.slane %v1082, %v1089
  %v1091 = vrot.slane %v1054, 4
  %v1092 = vsel %vm49, %v1091, %v1042
  %v1093 = vrot.slane %v1042, 4
  %v1094 = vsel %vm49, %v1054, %v1093
  %v1096 = vunpack.c.l.s4 1934713408
  %v1097 = vunpack.c.0.s8 %v1096
  %v1098 = vperm.slane %v1092, %v1097
  %v1100 = vunpack.c.l.s4 1934713408
  %v1101 = vunpack.c.0.s8 %v1100
  %v1102 = vperm.slane %v1094, %v1101
  %v1103 = vrot.slane %v1086, 4
  %v1104 = vsel %vm49, %v1103, %v1062
  %v1105 = vrot.slane %v1062, 4
  %v1106 = vsel %vm49, %v1086, %v1105
  %v1107 = vrot.slane %v1090, 4
  %v1108 = vsel %vm49, %v1107, %v1066
  %v1109 = vrot.slane %v1066, 4
  %v1110 = vsel %vm49, %v1090, %v1109
  %v1111 = vrot.slane %v1098, 4
  %v1112 = vsel %vm49, %v1111, %v1074
  %v1113 = vrot.slane %v1074, 4
  %v1114 = vsel %vm49, %v1098, %v1113
  %v1115 = vrot.slane %v1102, 4
  %v1116 = vsel %vm49, %v1115, %v1078
  %v1117 = vrot.slane %v1078, 4
  %v1118 = vsel %vm49, %v1102, %v1117
  %v1119 = vrot.slane %v814, 4
  %v1120 = vsel %vm49, %v1119, %v801
  %v1121 = vrot.slane %v801, 4
  %v1122 = vsel %vm49, %v814, %v1121
  %v1124 = vunpack.c.l.s4 1983009808
  %v1125 = vunpack.c.0.s8 %v1124
  %v1126 = vperm.slane %v1120, %v1125
  %v1128 = vunpack.c.l.s4 1983009808
  %v1129 = vunpack.c.0.s8 %v1128
  %v1130 = vperm.slane %v1122, %v1129
  %v1131 = vrot.slane %v820, 4
  %v1132 = vsel %vm49, %v1131, %v808
  %v1133 = vrot.slane %v808, 4
  %v1134 = vsel %vm49, %v820, %v1133
  %v1136 = vunpack.c.l.s4 1983009808
  %v1137 = vunpack.c.0.s8 %v1136
  %v1138 = vperm.slane %v1132, %v1137
  %v1140 = vunpack.c.l.s4 1983009808
  %v1141 = vunpack.c.0.s8 %v1140
  %v1142 = vperm.slane %v1134, %v1141
  %v1143 = vrot.slane %v838, 4
  %v1144 = vsel %vm49, %v1143, %v826
  %v1145 = vrot.slane %v826, 4
  %v1146 = vsel %vm49, %v838, %v1145
  %v1148 = vunpack.c.l.s4 1983009808
  %v1149 = vunpack.c.0.s8 %v1148
  %v1150 = vperm.slane %v1144, %v1149
  %v1152 = vunpack.c.l.s4 1983009808
  %v1153 = vunpack.c.0.s8 %v1152
  %v1154 = vperm.slane %v1146, %v1153
  %v1155 = vrot.slane %v844, 4
  %v1156 = vsel %vm49, %v1155, %v832
  %v1157 = vrot.slane %v832, 4
  %v1158 = vsel %vm49, %v844, %v1157
  %v1160 = vunpack.c.l.s4 1983009808
  %v1161 = vunpack.c.0.s8 %v1160
  %v1162 = vperm.slane %v1156, %v1161
  %v1164 = vunpack.c.l.s4 1983009808
  %v1165 = vunpack.c.0.s8 %v1164
  %v1166 = vperm.slane %v1158, %v1165
  %v1167 = vrot.slane %v1138, 4
  %v1168 = vsel %vm49, %v1167, %v1126
  %v1169 = vrot.slane %v1126, 4
  %v1170 = vsel %vm49, %v1138, %v1169
  %v1172 = vunpack.c.l.s4 1934713408
  %v1173 = vunpack.c.0.s8 %v1172
  %v1174 = vperm.slane %v1168, %v1173
  %v1176 = vunpack.c.l.s4 1934713408
  %v1177 = vunpack.c.0.s8 %v1176
  %v1178 = vperm.slane %v1170, %v1177
  %v1179 = vrot.slane %v1142, 4
  %v1180 = vsel %vm49, %v1179, %v1130
  %v1181 = vrot.slane %v1130, 4
  %v1182 = vsel %vm49, %v1142, %v1181
  %v1184 = vunpack.c.l.s4 1934713408
  %v1185 = vunpack.c.0.s8 %v1184
  %v1186 = vperm.slane %v1180, %v1185
  %v1188 = vunpack.c.l.s4 1934713408
  %v1189 = vunpack.c.0.s8 %v1188
  %v1190 = vperm.slane %v1182, %v1189
  %v1191 = vrot.slane %v1162, 4
  %v1192 = vsel %vm49, %v1191, %v1150
  %v1193 = vrot.slane %v1150, 4
  %v1194 = vsel %vm49, %v1162, %v1193
  %v1196 = vunpack.c.l.s4 1934713408
  %v1197 = vunpack.c.0.s8 %v1196
  %v1198 = vperm.slane %v1192, %v1197
  %v1200 = vunpack.c.l.s4 1934713408
  %v1201 = vunpack.c.0.s8 %v1200
  %v1202 = vperm.slane %v1194, %v1201
  %v1203 = vrot.slane %v1166, 4
  %v1204 = vsel %vm49, %v1203, %v1154
  %v1205 = vrot.slane %v1154, 4
  %v1206 = vsel %vm49, %v1166, %v1205
  %v1208 = vunpack.c.l.s4 1934713408
  %v1209 = vunpack.c.0.s8 %v1208
  %v1210 = vperm.slane %v1204, %v1209
  %v1212 = vunpack.c.l.s4 1934713408
  %v1213 = vunpack.c.0.s8 %v1212
  %v1214 = vperm.slane %v1206, %v1213
  %v1215 = vrot.slane %v1198, 4
  %v1216 = vsel %vm49, %v1215, %v1174
  %v1217 = vrot.slane %v1174, 4
  %v1218 = vsel %vm49, %v1198, %v1217
  %v1219 = vrot.slane %v1202, 4
  %v1220 = vsel %vm49, %v1219, %v1178
  %v1221 = vrot.slane %v1178, 4
  %v1222 = vsel %vm49, %v1202, %v1221
  %v1223 = vrot.slane %v1210, 4
  %v1224 = vsel %vm49, %v1223, %v1186
  %v1225 = vrot.slane %v1186, 4
  %v1226 = vsel %vm49, %v1210, %v1225
  %v1227 = vrot.slane %v1214, 4
  %v1228 = vsel %vm49, %v1227, %v1190
  %v1229 = vrot.slane %v1190, 4
  %v1230 = vsel %vm49, %v1214, %v1229
  %v1231 = vrot.slane %v862, 4
  %v1232 = vsel %vm49, %v1231, %v850
  %v1233 = vrot.slane %v850, 4
  %v1234 = vsel %vm49, %v862, %v1233
  %v1236 = vunpack.c.l.s4 1983009808
  %v1237 = vunpack.c.0.s8 %v1236
  %v1238 = vperm.slane %v1232, %v1237
  %v1240 = vunpack.c.l.s4 1983009808
  %v1241 = vunpack.c.0.s8 %v1240
  %v1242 = vperm.slane %v1234, %v1241
  %v1243 = vrot.slane %v868, 4
  %v1244 = vsel %vm49, %v1243, %v856
  %v1245 = vrot.slane %v856, 4
  %v1246 = vsel %vm49, %v868, %v1245
  %v1248 = vunpack.c.l.s4 1983009808
  %v1249 = vunpack.c.0.s8 %v1248
  %v1250 = vperm.slane %v1244, %v1249
  %v1252 = vunpack.c.l.s4 1983009808
  %v1253 = vunpack.c.0.s8 %v1252
  %v1254 = vperm.slane %v1246, %v1253
  %v1255 = vrot.slane %v886, 4
  %v1256 = vsel %vm49, %v1255, %v874
  %v1257 = vrot.slane %v874, 4
  %v1258 = vsel %vm49, %v886, %v1257
  %v1260 = vunpack.c.l.s4 1983009808
  %v1261 = vunpack.c.0.s8 %v1260
  %v1262 = vperm.slane %v1256, %v1261
  %v1264 = vunpack.c.l.s4 1983009808
  %v1265 = vunpack.c.0.s8 %v1264
  %v1266 = vperm.slane %v1258, %v1265
  %v1267 = vrot.slane %v892, 4
  %v1268 = vsel %vm49, %v1267, %v880
  %v1269 = vrot.slane %v880, 4
  %v1270 = vsel %vm49, %v892, %v1269
  %v1272 = vunpack.c.l.s4 1983009808
  %v1273 = vunpack.c.0.s8 %v1272
  %v1274 = vperm.slane %v1268, %v1273
  %v1276 = vunpack.c.l.s4 1983009808
  %v1277 = vunpack.c.0.s8 %v1276
  %v1278 = vperm.slane %v1270, %v1277
  %v1279 = vrot.slane %v1250, 4
  %v1280 = vsel %vm49, %v1279, %v1238
  %v1281 = vrot.slane %v1238, 4
  %v1282 = vsel %vm49, %v1250, %v1281
  %v1284 = vunpack.c.l.s4 1934713408
  %v1285 = vunpack.c.0.s8 %v1284
  %v1286 = vperm.slane %v1280, %v1285
  %v1288 = vunpack.c.l.s4 1934713408
  %v1289 = vunpack.c.0.s8 %v1288
  %v1290 = vperm.slane %v1282, %v1289
  %v1291 = vrot.slane %v1254, 4
  %v1292 = vsel %vm49, %v1291, %v1242
  %v1293 = vrot.slane %v1242, 4
  %v1294 = vsel %vm49, %v1254, %v1293
  %v1296 = vunpack.c.l.s4 1934713408
  %v1297 = vunpack.c.0.s8 %v1296
  %v1298 = vperm.slane %v1292, %v1297
  %v1300 = vunpack.c.l.s4 1934713408
  %v1301 = vunpack.c.0.s8 %v1300
  %v1302 = vperm.slane %v1294, %v1301
  %v1303 = vrot.slane %v1274, 4
  %v1304 = vsel %vm49, %v1303, %v1262
  %v1305 = vrot.slane %v1262, 4
  %v1306 = vsel %vm49, %v1274, %v1305
  %v1308 = vunpack.c.l.s4 1934713408
  %v1309 = vunpack.c.0.s8 %v1308
  %v1310 = vperm.slane %v1304, %v1309
  %v1312 = vunpack.c.l.s4 1934713408
  %v1313 = vunpack.c.0.s8 %v1312
  %v1314 = vperm.slane %v1306, %v1313
  %v1315 = vrot.slane %v1278, 4
  %v1316 = vsel %vm49, %v1315, %v1266
  %v1317 = vrot.slane %v1266, 4
  %v1318 = vsel %vm49, %v1278, %v1317
  %v1320 = vunpack.c.l.s4 1934713408
  %v1321 = vunpack.c.0.s8 %v1320
  %v1322 = vperm.slane %v1316, %v1321
  %v1324 = vunpack.c.l.s4 1934713408
  %v1325 = vunpack.c.0.s8 %v1324
  %v1326 = vperm.slane %v1318, %v1325
  %v1327 = vrot.slane %v1310, 4
  %v1328 = vsel %vm49, %v1327, %v1286
  %v1329 = vrot.slane %v1286, 4
  %v1330 = vsel %vm49, %v1310, %v1329
  %v1331 = vrot.slane %v1314, 4
  %v1332 = vsel %vm49, %v1331, %v1290
  %v1333 = vrot.slane %v1290, 4
  %v1334 = vsel %vm49, %v1314, %v1333
  %v1335 = vrot.slane %v1322, 4
  %v1336 = vsel %vm49, %v1335, %v1298
  %v1337 = vrot.slane %v1298, 4
  %v1338 = vsel %vm49, %v1322, %v1337
  %v1339 = vrot.slane %v1326, 4
  %v1340 = vsel %vm49, %v1339, %v1302
  %v1341 = vrot.slane %v1302, 4
  %v1342 = vsel %vm49, %v1326, %v1341
  %1343 = vxpose.xlu0.b32.start [1/16] %v992, 128
  %1344 = vxpose.xlu0.b32.cont [2/16] %v1104, 128
  %1345 = vxpose.xlu0.b32.cont [3/16] 0.0, 128
  %1346 = vxpose.xlu0.b32.cont [4/16] 0.0, 128
  %1347 = vxpose.xlu0.b32.cont [5/16] 0.0, 128
  %1348 = vxpose.xlu0.b32.cont [6/16] 0.0, 128
  %1349 = vxpose.xlu0.b32.cont [7/16] 0.0, 128
  %1350 = vxpose.xlu0.b32.cont [8/16] 0.0, 128
  %1351 = vxpose.xlu0.b32.cont [9/16] 0.0, 128
  %1352 = vxpose.xlu0.b32.cont [10/16] 0.0, 128
  %1353 = vxpose.xlu0.b32.cont [11/16] 0.0, 128
  %1354 = vxpose.xlu0.b32.cont [12/16] 0.0, 128
  %1355 = vxpose.xlu0.b32.cont [13/16] 0.0, 128
  %1356 = vxpose.xlu0.b32.cont [14/16] 0.0, 128
  %1357 = vxpose.xlu0.b32.cont [15/16] 0.0, 128
  %1358 = vxpose.xlu0.b32.end [16/16] 0.0, 128
  %v1359 = vpop.trf.xlu0
  %v1360 = vpop.trf.xlu0
  %v1361 = vpop.trf.xlu0
  %v1362 = vpop.trf.xlu0
  %v1363 = vpop.trf.xlu0
  %v1364 = vpop.trf.xlu0
  %v1365 = vpop.trf.xlu0
  %v1366 = vpop.trf.xlu0
  %v1367 = vpop.trf.xlu0
  %v1368 = vpop.trf.xlu0
  %v1369 = vpop.trf.xlu0
  %v1370 = vpop.trf.xlu0
  %v1371 = vpop.trf.xlu0
  %v1372 = vpop.trf.xlu0
  %v1373 = vpop.trf.xlu0
  %v1374 = vpop.trf.xlu0
  %1375 = vxpose.xlu0.b32.start [1/16] %v994, 128
  %1376 = vxpose.xlu0.b32.cont [2/16] %v1106, 128
  %1377 = vxpose.xlu0.b32.cont [3/16] 0.0, 128
  %1378 = vxpose.xlu0.b32.cont [4/16] 0.0, 128
  %1379 = vxpose.xlu0.b32.cont [5/16] 0.0, 128
  %1380 = vxpose.xlu0.b32.cont [6/16] 0.0, 128
  %1381 = vxpose.xlu0.b32.cont [7/16] 0.0, 128
  %1382 = vxpose.xlu0.b32.cont [8/16] 0.0, 128
  %1383 = vxpose.xlu0.b32.cont [9/16] 0.0, 128
  %1384 = vxpose.xlu0.b32.cont [10/16] 0.0, 128
  %1385 = vxpose.xlu0.b32.cont [11/16] 0.0, 128
  %1386 = vxpose.xlu0.b32.cont [12/16] 0.0, 128
  %1387 = vxpose.xlu0.b32.cont [13/16] 0.0, 128
  %1388 = vxpose.xlu0.b32.cont [14/16] 0.0, 128
  %1389 = vxpose.xlu0.b32.cont [15/16] 0.0, 128
  %1390 = vxpose.xlu0.b32.end [16/16] 0.0, 128
  %v1391 = vpop.trf.xlu0
  %v1392 = vpop.trf.xlu0
  %v1393 = vpop.trf.xlu0
  %v1394 = vpop.trf.xlu0
  %v1395 = vpop.trf.xlu0
  %v1396 = vpop.trf.xlu0
  %v1397 = vpop.trf.xlu0
  %v1398 = vpop.trf.xlu0
  %v1399 = vpop.trf.xlu0
  %v1400 = vpop.trf.xlu0
  %v1401 = vpop.trf.xlu0
  %v1402 = vpop.trf.xlu0
  %v1403 = vpop.trf.xlu0
  %v1404 = vpop.trf.xlu0
  %v1405 = vpop.trf.xlu0
  %v1406 = vpop.trf.xlu0
  %1407 = vxpose.xlu0.b32.start [1/16] %v996, 128
  %1408 = vxpose.xlu0.b32.cont [2/16] %v1108, 128
  %1409 = vxpose.xlu0.b32.cont [3/16] 0.0, 128
  %1410 = vxpose.xlu0.b32.cont [4/16] 0.0, 128
  %1411 = vxpose.xlu0.b32.cont [5/16] 0.0, 128
  %1412 = vxpose.xlu0.b32.cont [6/16] 0.0, 128
  %1413 = vxpose.xlu0.b32.cont [7/16] 0.0, 128
  %1414 = vxpose.xlu0.b32.cont [8/16] 0.0, 128
  %1415 = vxpose.xlu0.b32.cont [9/16] 0.0, 128
  %1416 = vxpose.xlu0.b32.cont [10/16] 0.0, 128
  %1417 = vxpose.xlu0.b32.cont [11/16] 0.0, 128
  %1418 = vxpose.xlu0.b32.cont [12/16] 0.0, 128
  %1419 = vxpose.xlu0.b32.cont [13/16] 0.0, 128
  %1420 = vxpose.xlu0.b32.cont [14/16] 0.0, 128
  %1421 = vxpose.xlu0.b32.cont [15/16] 0.0, 128
  %1422 = vxpose.xlu0.b32.end [16/16] 0.0, 128
  %v1423 = vpop.trf.xlu0
  %v1424 = vpop.trf.xlu0
  %v1425 = vpop.trf.xlu0
  %v1426 = vpop.trf.xlu0
  %v1427 = vpop.trf.xlu0
  %v1428 = vpop.trf.xlu0
  %v1429 = vpop.trf.xlu0
  %v1430 = vpop.trf.xlu0
  %v1431 = vpop.trf.xlu0
  %v1432 = vpop.trf.xlu0
  %v1433 = vpop.trf.xlu0
  %v1434 = vpop.trf.xlu0
  %v1435 = vpop.trf.xlu0
  %v1436 = vpop.trf.xlu0
  %v1437 = vpop.trf.xlu0
  %v1438 = vpop.trf.xlu0
  %1439 = vxpose.xlu0.b32.start [1/16] %v998, 128
  %1440 = vxpose.xlu0.b32.cont [2/16] %v1110, 128
  %1441 = vxpose.xlu0.b32.cont [3/16] 0.0, 128
  %1442 = vxpose.xlu0.b32.cont [4/16] 0.0, 128
  %1443 = vxpose.xlu0.b32.cont [5/16] 0.0, 128
  %1444 = vxpose.xlu0.b32.cont [6/16] 0.0, 128
  %1445 = vxpose.xlu0.b32.cont [7/16] 0.0, 128
  %1446 = vxpose.xlu0.b32.cont [8/16] 0.0, 128
  %1447 = vxpose.xlu0.b32.cont [9/16] 0.0, 128
  %1448 = vxpose.xlu0.b32.cont [10/16] 0.0, 128
  %1449 = vxpose.xlu0.b32.cont [11/16] 0.0, 128
  %1450 = vxpose.xlu0.b32.cont [12/16] 0.0, 128
  %1451 = vxpose.xlu0.b32.cont [13/16] 0.0, 128
  %1452 = vxpose.xlu0.b32.cont [14/16] 0.0, 128
  %1453 = vxpose.xlu0.b32.cont [15/16] 0.0, 128
  %1454 = vxpose.xlu0.b32.end [16/16] 0.0, 128
  %v1455 = vpop.trf.xlu0
  %v1456 = vpop.trf.xlu0
  %v1457 = vpop.trf.xlu0
  %v1458 = vpop.trf.xlu0
  %v1459 = vpop.trf.xlu0
  %v1460 = vpop.trf.xlu0
  %v1461 = vpop.trf.xlu0
  %v1462 = vpop.trf.xlu0
  %v1463 = vpop.trf.xlu0
  %v1464 = vpop.trf.xlu0
  %v1465 = vpop.trf.xlu0
  %v1466 = vpop.trf.xlu0
  %v1467 = vpop.trf.xlu0
  %v1468 = vpop.trf.xlu0
  %v1469 = vpop.trf.xlu0
  %v1470 = vpop.trf.xlu0
  %1471 = vxpose.xlu0.b32.start [1/16] %v1000, 128
  %1472 = vxpose.xlu0.b32.cont [2/16] %v1112, 128
  %1473 = vxpose.xlu0.b32.cont [3/16] 0.0, 128
  %1474 = vxpose.xlu0.b32.cont [4/16] 0.0, 128
  %1475 = vxpose.xlu0.b32.cont [5/16] 0.0, 128
  %1476 = vxpose.xlu0.b32.cont [6/16] 0.0, 128
  %1477 = vxpose.xlu0.b32.cont [7/16] 0.0, 128
  %1478 = vxpose.xlu0.b32.cont [8/16] 0.0, 128
  %1479 = vxpose.xlu0.b32.cont [9/16] 0.0, 128
  %1480 = vxpose.xlu0.b32.cont [10/16] 0.0, 128
  %1481 = vxpose.xlu0.b32.cont [11/16] 0.0, 128
  %1482 = vxpose.xlu0.b32.cont [12/16] 0.0, 128
  %1483 = vxpose.xlu0.b32.cont [13/16] 0.0, 128
  %1484 = vxpose.xlu0.b32.cont [14/16] 0.0, 128
  %1485 = vxpose.xlu0.b32.cont [15/16] 0.0, 128
  %1486 = vxpose.xlu0.b32.end [16/16] 0.0, 128
  %v1487 = vpop.trf.xlu0
  %v1488 = vpop.trf.xlu0
  %v1489 = vpop.trf.xlu0
  %v1490 = vpop.trf.xlu0
  %v1491 = vpop.trf.xlu0
  %v1492 = vpop.trf.xlu0
  %v1493 = vpop.trf.xlu0
  %v1494 = vpop.trf.xlu0
  %v1495 = vpop.trf.xlu0
  %v1496 = vpop.trf.xlu0
  %v1497 = vpop.trf.xlu0
  %v1498 = vpop.trf.xlu0
  %v1499 = vpop.trf.xlu0
  %v1500 = vpop.trf.xlu0
  %v1501 = vpop.trf.xlu0
  %v1502 = vpop.trf.xlu0
  %1503 = vxpose.xlu0.b32.start [1/16] %v1002, 128
  %1504 = vxpose.xlu0.b32.cont [2/16] %v1114, 128
  %1505 = vxpose.xlu0.b32.cont [3/16] 0.0, 128
  %1506 = vxpose.xlu0.b32.cont [4/16] 0.0, 128
  %1507 = vxpose.xlu0.b32.cont [5/16] 0.0, 128
  %1508 = vxpose.xlu0.b32.cont [6/16] 0.0, 128
  %1509 = vxpose.xlu0.b32.cont [7/16] 0.0, 128
  %1510 = vxpose.xlu0.b32.cont [8/16] 0.0, 128
  %1511 = vxpose.xlu0.b32.cont [9/16] 0.0, 128
  %1512 = vxpose.xlu0.b32.cont [10/16] 0.0, 128
  %1513 = vxpose.xlu0.b32.cont [11/16] 0.0, 128
  %1514 = vxpose.xlu0.b32.cont [12/16] 0.0, 128
  %1515 = vxpose.xlu0.b32.cont [13/16] 0.0, 128
  %1516 = vxpose.xlu0.b32.cont [14/16] 0.0, 128
  %1517 = vxpose.xlu0.b32.cont [15/16] 0.0, 128
  %1518 = vxpose.xlu0.b32.end [16/16] 0.0, 128
  %v1519 = vpop.trf.xlu0
  %v1520 = vpop.trf.xlu0
  %v1521 = vpop.trf.xlu0
  %v1522 = vpop.trf.xlu0
  %v1523 = vpop.trf.xlu0
  %v1524 = vpop.trf.xlu0
  %v1525 = vpop.trf.xlu0
  %v1526 = vpop.trf.xlu0
  %v1527 = vpop.trf.xlu0
  %v1528 = vpop.trf.xlu0
  %v1529 = vpop.trf.xlu0
  %v1530 = vpop.trf.xlu0
  %v1531 = vpop.trf.xlu0
  %v1532 = vpop.trf.xlu0
  %v1533 = vpop.trf.xlu0
  %v1534 = vpop.trf.xlu0
  %1535 = vxpose.xlu0.b32.start [1/16] %v1004, 128
  %1536 = vxpose.xlu0.b32.cont [2/16] %v1116, 128
  %1537 = vxpose.xlu0.b32.cont [3/16] 0.0, 128
  %1538 = vxpose.xlu0.b32.cont [4/16] 0.0, 128
  %1539 = vxpose.xlu0.b32.cont [5/16] 0.0, 128
  %1540 = vxpose.xlu0.b32.cont [6/16] 0.0, 128
  %1541 = vxpose.xlu0.b32.cont [7/16] 0.0, 128
  %1542 = vxpose.xlu0.b32.cont [8/16] 0.0, 128
  %1543 = vxpose.xlu0.b32.cont [9/16] 0.0, 128
  %1544 = vxpose.xlu0.b32.cont [10/16] 0.0, 128
  %1545 = vxpose.xlu0.b32.cont [11/16] 0.0, 128
  %1546 = vxpose.xlu0.b32.cont [12/16] 0.0, 128
  %1547 = vxpose.xlu0.b32.cont [13/16] 0.0, 128
  %1548 = vxpose.xlu0.b32.cont [14/16] 0.0, 128
  %1549 = vxpose.xlu0.b32.cont [15/16] 0.0, 128
  %1550 = vxpose.xlu0.b32.end [16/16] 0.0, 128
  %v1551 = vpop.trf.xlu0
  %v1552 = vpop.trf.xlu0
  %v1553 = vpop.trf.xlu0
  %v1554 = vpop.trf.xlu0
  %v1555 = vpop.trf.xlu0
  %v1556 = vpop.trf.xlu0
  %v1557 = vpop.trf.xlu0
  %v1558 = vpop.trf.xlu0
  %v1559 = vpop.trf.xlu0
  %v1560 = vpop.trf.xlu0
  %v1561 = vpop.trf.xlu0
  %v1562 = vpop.trf.xlu0
  %v1563 = vpop.trf.xlu0
  %v1564 = vpop.trf.xlu0
  %v1565 = vpop.trf.xlu0
  %v1566 = vpop.trf.xlu0
  %1567 = vxpose.xlu0.b32.start [1/16] %v1006, 128
  %1568 = vxpose.xlu0.b32.cont [2/16] %v1118, 128
  %1569 = vxpose.xlu0.b32.cont [3/16] 0.0, 128
  %1570 = vxpose.xlu0.b32.cont [4/16] 0.0, 128
  %1571 = vxpose.xlu0.b32.cont [5/16] 0.0, 128
  %1572 = vxpose.xlu0.b32.cont [6/16] 0.0, 128
  %1573 = vxpose.xlu0.b32.cont [7/16] 0.0, 128
  %1574 = vxpose.xlu0.b32.cont [8/16] 0.0, 128
  %1575 = vxpose.xlu0.b32.cont [9/16] 0.0, 128
  %1576 = vxpose.xlu0.b32.cont [10/16] 0.0, 128
  %1577 = vxpose.xlu0.b32.cont [11/16] 0.0, 128
  %1578 = vxpose.xlu0.b32.cont [12/16] 0.0, 128
  %1579 = vxpose.xlu0.b32.cont [13/16] 0.0, 128
  %1580 = vxpose.xlu0.b32.cont [14/16] 0.0, 128
  %1581 = vxpose.xlu0.b32.cont [15/16] 0.0, 128
  %1582 = vxpose.xlu0.b32.end [16/16] 0.0, 128
  %v1583 = vpop.trf.xlu0
  %v1584 = vpop.trf.xlu0
  %v1585 = vpop.trf.xlu0
  %v1586 = vpop.trf.xlu0
  %v1587 = vpop.trf.xlu0
  %v1588 = vpop.trf.xlu0
  %v1589 = vpop.trf.xlu0
  %v1590 = vpop.trf.xlu0
  %v1591 = vpop.trf.xlu0
  %v1592 = vpop.trf.xlu0
  %v1593 = vpop.trf.xlu0
  %v1594 = vpop.trf.xlu0
  %v1595 = vpop.trf.xlu0
  %v1596 = vpop.trf.xlu0
  %v1597 = vpop.trf.xlu0
  %v1598 = vpop.trf.xlu0
  %1599 = vxpose.xlu0.b32.start [1/16] %v1216, 128
  %1600 = vxpose.xlu0.b32.cont [2/16] %v1328, 128
  %1601 = vxpose.xlu0.b32.cont [3/16] 0.0, 128
  %1602 = vxpose.xlu0.b32.cont [4/16] 0.0, 128
  %1603 = vxpose.xlu0.b32.cont [5/16] 0.0, 128
  %1604 = vxpose.xlu0.b32.cont [6/16] 0.0, 128
  %1605 = vxpose.xlu0.b32.cont [7/16] 0.0, 128
  %1606 = vxpose.xlu0.b32.cont [8/16] 0.0, 128
  %1607 = vxpose.xlu0.b32.cont [9/16] 0.0, 128
  %1608 = vxpose.xlu0.b32.cont [10/16] 0.0, 128
  %1609 = vxpose.xlu0.b32.cont [11/16] 0.0, 128
  %1610 = vxpose.xlu0.b32.cont [12/16] 0.0, 128
  %1611 = vxpose.xlu0.b32.cont [13/16] 0.0, 128
  %1612 = vxpose.xlu0.b32.cont [14/16] 0.0, 128
  %1613 = vxpose.xlu0.b32.cont [15/16] 0.0, 128
  %1614 = vxpose.xlu0.b32.end [16/16] 0.0, 128
  %v1615 = vpop.trf.xlu0
  %v1616 = vpop.trf.xlu0
  %v1617 = vpop.trf.xlu0
  %v1618 = vpop.trf.xlu0
  %v1619 = vpop.trf.xlu0
  %v1620 = vpop.trf.xlu0
  %v1621 = vpop.trf.xlu0
  %v1622 = vpop.trf.xlu0
  %v1623 = vpop.trf.xlu0
  %v1624 = vpop.trf.xlu0
  %v1625 = vpop.trf.xlu0
  %v1626 = vpop.trf.xlu0
  %v1627 = vpop.trf.xlu0
  %v1628 = vpop.trf.xlu0
  %v1629 = vpop.trf.xlu0
  %v1630 = vpop.trf.xlu0
  %1631 = vxpose.xlu0.b32.start [1/16] %v1218, 128
  %1632 = vxpose.xlu0.b32.cont [2/16] %v1330, 128
  %1633 = vxpose.xlu0.b32.cont [3/16] 0.0, 128
  %1634 = vxpose.xlu0.b32.cont [4/16] 0.0, 128
  %1635 = vxpose.xlu0.b32.cont [5/16] 0.0, 128
  %1636 = vxpose.xlu0.b32.cont [6/16] 0.0, 128
  %1637 = vxpose.xlu0.b32.cont [7/16] 0.0, 128
  %1638 = vxpose.xlu0.b32.cont [8/16] 0.0, 128
  %1639 = vxpose.xlu0.b32.cont [9/16] 0.0, 128
  %1640 = vxpose.xlu0.b32.cont [10/16] 0.0, 128
  %1641 = vxpose.xlu0.b32.cont [11/16] 0.0, 128
  %1642 = vxpose.xlu0.b32.cont [12/16] 0.0, 128
  %1643 = vxpose.xlu0.b32.cont [13/16] 0.0, 128
  %1644 = vxpose.xlu0.b32.cont [14/16] 0.0, 128
  %1645 = vxpose.xlu0.b32.cont [15/16] 0.0, 128
  %1646 = vxpose.xlu0.b32.end [16/16] 0.0, 128
  %v1647 = vpop.trf.xlu0
  %v1648 = vpop.trf.xlu0
  %v1649 = vpop.trf.xlu0
  %v1650 = vpop.trf.xlu0
  %v1651 = vpop.trf.xlu0
  %v1652 = vpop.trf.xlu0
  %v1653 = vpop.trf.xlu0
  %v1654 = vpop.trf.xlu0
  %v1655 = vpop.trf.xlu0
  %v1656 = vpop.trf.xlu0
  %v1657 = vpop.trf.xlu0
  %v1658 = vpop.trf.xlu0
  %v1659 = vpop.trf.xlu0
  %v1660 = vpop.trf.xlu0
  %v1661 = vpop.trf.xlu0
  %v1662 = vpop.trf.xlu0
  %1663 = vxpose.xlu0.b32.start [1/16] %v1220, 128
  %1664 = vxpose.xlu0.b32.cont [2/16] %v1332, 128
  %1665 = vxpose.xlu0.b32.cont [3/16] 0.0, 128
  %1666 = vxpose.xlu0.b32.cont [4/16] 0.0, 128
  %1667 = vxpose.xlu0.b32.cont [5/16] 0.0, 128
  %1668 = vxpose.xlu0.b32.cont [6/16] 0.0, 128
  %1669 = vxpose.xlu0.b32.cont [7/16] 0.0, 128
  %1670 = vxpose.xlu0.b32.cont [8/16] 0.0, 128
  %1671 = vxpose.xlu0.b32.cont [9/16] 0.0, 128
  %1672 = vxpose.xlu0.b32.cont [10/16] 0.0, 128
  %1673 = vxpose.xlu0.b32.cont [11/16] 0.0, 128
  %1674 = vxpose.xlu0.b32.cont [12/16] 0.0, 128
  %1675 = vxpose.xlu0.b32.cont [13/16] 0.0, 128
  %1676 = vxpose.xlu0.b32.cont [14/16] 0.0, 128
  %1677 = vxpose.xlu0.b32.cont [15/16] 0.0, 128
  %1678 = vxpose.xlu0.b32.end [16/16] 0.0, 128
  %v1679 = vpop.trf.xlu0
  %v1680 = vpop.trf.xlu0
  %v1681 = vpop.trf.xlu0
  %v1682 = vpop.trf.xlu0
  %v1683 = vpop.trf.xlu0
  %v1684 = vpop.trf.xlu0
  %v1685 = vpop.trf.xlu0
  %v1686 = vpop.trf.xlu0
  %v1687 = vpop.trf.xlu0
  %v1688 = vpop.trf.xlu0
  %v1689 = vpop.trf.xlu0
  %v1690 = vpop.trf.xlu0
  %v1691 = vpop.trf.xlu0
  %v1692 = vpop.trf.xlu0
  %v1693 = vpop.trf.xlu0
  %v1694 = vpop.trf.xlu0
  %1695 = vxpose.xlu0.b32.start [1/16] %v1222, 128
  %1696 = vxpose.xlu0.b32.cont [2/16] %v1334, 128
  %1697 = vxpose.xlu0.b32.cont [3/16] 0.0, 128
  %1698 = vxpose.xlu0.b32.cont [4/16] 0.0, 128
  %1699 = vxpose.xlu0.b32.cont [5/16] 0.0, 128
  %1700 = vxpose.xlu0.b32.cont [6/16] 0.0, 128
  %1701 = vxpose.xlu0.b32.cont [7/16] 0.0, 128
  %1702 = vxpose.xlu0.b32.cont [8/16] 0.0, 128
  %1703 = vxpose.xlu0.b32.cont [9/16] 0.0, 128
  %1704 = vxpose.xlu0.b32.cont [10/16] 0.0, 128
  %1705 = vxpose.xlu0.b32.cont [11/16] 0.0, 128
  %1706 = vxpose.xlu0.b32.cont [12/16] 0.0, 128
  %1707 = vxpose.xlu0.b32.cont [13/16] 0.0, 128
  %1708 = vxpose.xlu0.b32.cont [14/16] 0.0, 128
  %1709 = vxpose.xlu0.b32.cont [15/16] 0.0, 128
  %1710 = vxpose.xlu0.b32.end [16/16] 0.0, 128
  %v1711 = vpop.trf.xlu0
  %v1712 = vpop.trf.xlu0
  %v1713 = vpop.trf.xlu0
  %v1714 = vpop.trf.xlu0
  %v1715 = vpop.trf.xlu0
  %v1716 = vpop.trf.xlu0
  %v1717 = vpop.trf.xlu0
  %v1718 = vpop.trf.xlu0
  %v1719 = vpop.trf.xlu0
  %v1720 = vpop.trf.xlu0
  %v1721 = vpop.trf.xlu0
  %v1722 = vpop.trf.xlu0
  %v1723 = vpop.trf.xlu0
  %v1724 = vpop.trf.xlu0
  %v1725 = vpop.trf.xlu0
  %v1726 = vpop.trf.xlu0
  %1727 = vxpose.xlu0.b32.start [1/16] %v1224, 128
  %1728 = vxpose.xlu0.b32.cont [2/16] %v1336, 128
  %1729 = vxpose.xlu0.b32.cont [3/16] 0.0, 128
  %1730 = vxpose.xlu0.b32.cont [4/16] 0.0, 128
  %1731 = vxpose.xlu0.b32.cont [5/16] 0.0, 128
  %1732 = vxpose.xlu0.b32.cont [6/16] 0.0, 128
  %1733 = vxpose.xlu0.b32.cont [7/16] 0.0, 128
  %1734 = vxpose.xlu0.b32.cont [8/16] 0.0, 128
  %1735 = vxpose.xlu0.b32.cont [9/16] 0.0, 128
  %1736 = vxpose.xlu0.b32.cont [10/16] 0.0, 128
  %1737 = vxpose.xlu0.b32.cont [11/16] 0.0, 128
  %1738 = vxpose.xlu0.b32.cont [12/16] 0.0, 128
  %1739 = vxpose.xlu0.b32.cont [13/16] 0.0, 128
  %1740 = vxpose.xlu0.b32.cont [14/16] 0.0, 128
  %1741 = vxpose.xlu0.b32.cont [15/16] 0.0, 128
  %1742 = vxpose.xlu0.b32.end [16/16] 0.0, 128
  %v1743 = vpop.trf.xlu0
  %v1744 = vpop.trf.xlu0
  %v1745 = vpop.trf.xlu0
  %v1746 = vpop.trf.xlu0
  %v1747 = vpop.trf.xlu0
  %v1748 = vpop.trf.xlu0
  %v1749 = vpop.trf.xlu0
  %v1750 = vpop.trf.xlu0
  %v1751 = vpop.trf.xlu0
  %v1752 = vpop.trf.xlu0
  %v1753 = vpop.trf.xlu0
  %v1754 = vpop.trf.xlu0
  %v1755 = vpop.trf.xlu0
  %v1756 = vpop.trf.xlu0
  %v1757 = vpop.trf.xlu0
  %v1758 = vpop.trf.xlu0
  %1759 = vxpose.xlu0.b32.start [1/16] %v1226, 128
  %1760 = vxpose.xlu0.b32.cont [2/16] %v1338, 128
  %1761 = vxpose.xlu0.b32.cont [3/16] 0.0, 128
  %1762 = vxpose.xlu0.b32.cont [4/16] 0.0, 128
  %1763 = vxpose.xlu0.b32.cont [5/16] 0.0, 128
  %1764 = vxpose.xlu0.b32.cont [6/16] 0.0, 128
  %1765 = vxpose.xlu0.b32.cont [7/16] 0.0, 128
  %1766 = vxpose.xlu0.b32.cont [8/16] 0.0, 128
  %1767 = vxpose.xlu0.b32.cont [9/16] 0.0, 128
  %1768 = vxpose.xlu0.b32.cont [10/16] 0.0, 128
  %1769 = vxpose.xlu0.b32.cont [11/16] 0.0, 128
  %1770 = vxpose.xlu0.b32.cont [12/16] 0.0, 128
  %1771 = vxpose.xlu0.b32.cont [13/16] 0.0, 128
  %1772 = vxpose.xlu0.b32.cont [14/16] 0.0, 128
  %1773 = vxpose.xlu0.b32.cont [15/16] 0.0, 128
  %1774 = vxpose.xlu0.b32.end [16/16] 0.0, 128
  %v1775 = vpop.trf.xlu0
  %v1776 = vpop.trf.xlu0
  %v1777 = vpop.trf.xlu0
  %v1778 = vpop.trf.xlu0
  %v1779 = vpop.trf.xlu0
  %v1780 = vpop.trf.xlu0
  %v1781 = vpop.trf.xlu0
  %v1782 = vpop.trf.xlu0
  %v1783 = vpop.trf.xlu0
  %v1784 = vpop.trf.xlu0
  %v1785 = vpop.trf.xlu0
  %v1786 = vpop.trf.xlu0
  %v1787 = vpop.trf.xlu0
  %v1788 = vpop.trf.xlu0
  %v1789 = vpop.trf.xlu0
  %v1790 = vpop.trf.xlu0
  %1791 = vxpose.xlu0.b32.start [1/16] %v1228, 128
  %1792 = vxpose.xlu0.b32.cont [2/16] %v1340, 128
  %1793 = vxpose.xlu0.b32.cont [3/16] 0.0, 128
  %1794 = vxpose.xlu0.b32.cont [4/16] 0.0, 128
  %1795 = vxpose.xlu0.b32.cont [5/16] 0.0, 128
  %1796 = vxpose.xlu0.b32.cont [6/16] 0.0, 128
  %1797 = vxpose.xlu0.b32.cont [7/16] 0.0, 128
  %1798 = vxpose.xlu0.b32.cont [8/16] 0.0, 128
  %1799 = vxpose.xlu0.b32.cont [9/16] 0.0, 128
  %1800 = vxpose.xlu0.b32.cont [10/16] 0.0, 128
  %1801 = vxpose.xlu0.b32.cont [11/16] 0.0, 128
  %1802 = vxpose.xlu0.b32.cont [12/16] 0.0, 128
  %1803 = vxpose.xlu0.b32.cont [13/16] 0.0, 128
  %1804 = vxpose.xlu0.b32.cont [14/16] 0.0, 128
  %1805 = vxpose.xlu0.b32.cont [15/16] 0.0, 128
  %1806 = vxpose.xlu0.b32.end [16/16] 0.0, 128
  %v1807 = vpop.trf.xlu0
  %v1808 = vpop.trf.xlu0
  %v1809 = vpop.trf.xlu0
  %v1810 = vpop.trf.xlu0
  %v1811 = vpop.trf.xlu0
  %v1812 = vpop.trf.xlu0
  %v1813 = vpop.trf.xlu0
  %v1814 = vpop.trf.xlu0
  %v1815 = vpop.trf.xlu0
  %v1816 = vpop.trf.xlu0
  %v1817 = vpop.trf.xlu0
  %v1818 = vpop.trf.xlu0
  %v1819 = vpop.trf.xlu0
  %v1820 = vpop.trf.xlu0
  %v1821 = vpop.trf.xlu0
  %v1822 = vpop.trf.xlu0
  %1823 = vxpose.xlu0.b32.start [1/16] %v1230, 128
  %1824 = vxpose.xlu0.b32.cont [2/16] %v1342, 128
  %1825 = vxpose.xlu0.b32.cont [3/16] 0.0, 128
  %1826 = vxpose.xlu0.b32.cont [4/16] 0.0, 128
  %1827 = vxpose.xlu0.b32.cont [5/16] 0.0, 128
  %1828 = vxpose.xlu0.b32.cont [6/16] 0.0, 128
  %1829 = vxpose.xlu0.b32.cont [7/16] 0.0, 128
  %1830 = vxpose.xlu0.b32.cont [8/16] 0.0, 128
  %1831 = vxpose.xlu0.b32.cont [9/16] 0.0, 128
  %1832 = vxpose.xlu0.b32.cont [10/16] 0.0, 128
  %1833 = vxpose.xlu0.b32.cont [11/16] 0.0, 128
  %1834 = vxpose.xlu0.b32.cont [12/16] 0.0, 128
  %1835 = vxpose.xlu0.b32.cont [13/16] 0.0, 128
  %1836 = vxpose.xlu0.b32.cont [14/16] 0.0, 128
  %1837 = vxpose.xlu0.b32.cont [15/16] 0.0, 128
  %1838 = vxpose.xlu0.b32.end [16/16] 0.0, 128
  %v1839 = vpop.trf.xlu0
  %v1840 = vpop.trf.xlu0
  %v1841 = vpop.trf.xlu0
  %v1842 = vpop.trf.xlu0
  %v1843 = vpop.trf.xlu0
  %v1844 = vpop.trf.xlu0
  %v1845 = vpop.trf.xlu0
  %v1846 = vpop.trf.xlu0
  %v1847 = vpop.trf.xlu0
  %v1848 = vpop.trf.xlu0
  %v1849 = vpop.trf.xlu0
  %v1850 = vpop.trf.xlu0
  %v1851 = vpop.trf.xlu0
  %v1852 = vpop.trf.xlu0
  %v1853 = vpop.trf.xlu0
  %v1854 = vpop.trf.xlu0
  %v1855 = vld [vmem:[%s1] sm:$0xff]
  %v1856 = vld [vmem:[%s1 + $0x8] sm:$0xff]
  %v1858 = vsel %vm620, %v1359, 0
  %v1861 = vsel %vm620, %v1391, 0
  %v1864 = vsel %vm620, %v1423, 0
  %v1867 = vsel %vm620, %v1455, 0
  %v1870 = vsel %vm620, %v1487, 0
  %v1873 = vsel %vm620, %v1519, 0
  %v1876 = vsel %vm620, %v1551, 0
  %v1879 = vsel %vm620, %v1583, 0
  %v1882 = vsel %vm620, %v1615, 0
  %v1885 = vsel %vm620, %v1647, 0
  %v1888 = vsel %vm620, %v1679, 0
  %v1891 = vsel %vm620, %v1711, 0
  %v1894 = vsel %vm620, %v1743, 0
  %v1897 = vsel %vm620, %v1775, 0
  %v1900 = vsel %vm620, %v1807, 0
  %v1903 = vsel %vm620, %v1839, 0
  %v1906 = vsel %vm620, %v1855, 0
  %v1909 = vsel %vm620, %v1856, 0
  %1911 = vmatpush.xpose.msra.mxu0 0.0
  %1912 = vmatpush.xpose.msra.mxu0 0.0
  %1913 = vmatpush.xpose.msra.mxu0 0.0
  %1914 = vmatpush.xpose.msra.mxu0 0.0
  %1915 = vmatpush.xpose.msra.mxu0 0.0
  %1916 = vmatpush.xpose.msra.mxu0 0.0
  %1917 = vmatpush.xpose.msra.mxu0 0.0
  %1918 = vmatpush.xpose.msra.mxu0 0.0
  %1919 = vmatpush.xpose.msra.mxu0 0.0
  %1920 = vmatpush.xpose.msra.mxu0 0.0
  %1921 = vmatpush.xpose.msra.mxu0 0.0
  %1922 = vmatpush.xpose.msra.mxu0 0.0
  %1923 = vmatpush.xpose.msra.mxu0 0.0
  %1924 = vmatpush.xpose.msra.mxu0 0.0
  %1925 = vmatpush.xpose.msra.mxu0 %v1909
  %1926 = vmatpush.xpose.msra.mxu0 %v1906
  %1927 = vmatmul.f32.gmra.mxu0 %v1858
  %v1928 = vpop.f32.mrf.mxu0
  %v1929 = vadd.f32 0.0, %v1928
  %1930 = vmatmul.f32.gmra.mxu0 %v1861
  %v1931 = vpop.f32.mrf.mxu0
  %v1932 = vadd.f32 0.0, %v1931
  %1933 = vmatmul.f32.gmra.mxu0 %v1864
  %v1934 = vpop.f32.mrf.mxu0
  %v1935 = vadd.f32 0.0, %v1934
  %1936 = vmatmul.f32.gmra.mxu0 %v1867
  %v1937 = vpop.f32.mrf.mxu0
  %v1938 = vadd.f32 0.0, %v1937
  %1939 = vmatmul.f32.gmra.mxu0 %v1870
  %v1940 = vpop.f32.mrf.mxu0
  %v1941 = vadd.f32 0.0, %v1940
  %1942 = vmatmul.f32.gmra.mxu0 %v1873
  %v1943 = vpop.f32.mrf.mxu0
  %v1944 = vadd.f32 0.0, %v1943
  %1945 = vmatmul.f32.gmra.mxu0 %v1876
  %v1946 = vpop.f32.mrf.mxu0
  %v1947 = vadd.f32 0.0, %v1946
  %1948 = vmatmul.f32.gmra.mxu0 %v1879
  %v1949 = vpop.f32.mrf.mxu0
  %v1950 = vadd.f32 0.0, %v1949
  %1951 = vmatmul.f32.gmra.mxu0 %v1882
  %v1952 = vpop.f32.mrf.mxu0
  %v1953 = vadd.f32 0.0, %v1952
  %1954 = vmatmul.f32.gmra.mxu0 %v1885
  %v1955 = vpop.f32.mrf.mxu0
  %v1956 = vadd.f32 0.0, %v1955
  %1957 = vmatmul.f32.gmra.mxu0 %v1888
  %v1958 = vpop.f32.mrf.mxu0
  %v1959 = vadd.f32 0.0, %v1958
  %1960 = vmatmul.f32.gmra.mxu0 %v1891
  %v1961 = vpop.f32.mrf.mxu0
  %v1962 = vadd.f32 0.0, %v1961
  %1963 = vmatmul.f32.gmra.mxu0 %v1894
  %v1964 = vpop.f32.mrf.mxu0
  %v1965 = vadd.f32 0.0, %v1964
  %1966 = vmatmul.f32.gmra.mxu0 %v1897
  %v1967 = vpop.f32.mrf.mxu0
  %v1968 = vadd.f32 0.0, %v1967
  %1969 = vmatmul.f32.gmra.mxu0 %v1900
  %v1970 = vpop.f32.mrf.mxu0
  %v1971 = vadd.f32 0.0, %v1970
  %1972 = vmatmul.f32.gmra.mxu0 %v1903
  %v1973 = vpop.f32.mrf.mxu0
  %v1974 = vadd.f32 0.0, %v1973
  %1975 = vdwg.mxu0
  %1976 = vxpose.xlu0.b32.start [1/16] %v1929, 128
  %1977 = vxpose.xlu0.b32.cont [2/16] 0.0, 128
  %1978 = vxpose.xlu0.b32.cont [3/16] 0.0, 128
  %1979 = vxpose.xlu0.b32.cont [4/16] 0.0, 128
  %1980 = vxpose.xlu0.b32.cont [5/16] 0.0, 128
  %1981 = vxpose.xlu0.b32.cont [6/16] 0.0, 128
  %1982 = vxpose.xlu0.b32.cont [7/16] 0.0, 128
  %1983 = vxpose.xlu0.b32.cont [8/16] 0.0, 128
  %1984 = vxpose.xlu0.b32.cont [9/16] 0.0, 128
  %1985 = vxpose.xlu0.b32.cont [10/16] 0.0, 128
  %1986 = vxpose.xlu0.b32.cont [11/16] 0.0, 128
  %1987 = vxpose.xlu0.b32.cont [12/16] 0.0, 128
  %1988 = vxpose.xlu0.b32.cont [13/16] 0.0, 128
  %1989 = vxpose.xlu0.b32.cont [14/16] 0.0, 128
  %1990 = vxpose.xlu0.b32.cont [15/16] 0.0, 128
  %1991 = vxpose.xlu0.b32.end [16/16] 0.0, 128
  %v1992 = vpop.trf.xlu0
  %v1993 = vpop.trf.xlu0
  %v1994 = vpop.trf.xlu0
  %v1995 = vpop.trf.xlu0
  %v1996 = vpop.trf.xlu0
  %v1997 = vpop.trf.xlu0
  %v1998 = vpop.trf.xlu0
  %v1999 = vpop.trf.xlu0
  %v2000 = vpop.trf.xlu0
  %v2001 = vpop.trf.xlu0
  %v2002 = vpop.trf.xlu0
  %v2003 = vpop.trf.xlu0
  %v2004 = vpop.trf.xlu0
  %v2005 = vpop.trf.xlu0
  %v2006 = vpop.trf.xlu0
  %v2007 = vpop.trf.xlu0
  %2008 = vxpose.xlu0.b32.start [1/16] %v1932, 128
  %2009 = vxpose.xlu0.b32.cont [2/16] 0.0, 128
  %2010 = vxpose.xlu0.b32.cont [3/16] 0.0, 128
  %2011 = vxpose.xlu0.b32.cont [4/16] 0.0, 128
  %2012 = vxpose.xlu0.b32.cont [5/16] 0.0, 128
  %2013 = vxpose.xlu0.b32.cont [6/16] 0.0, 128
  %2014 = vxpose.xlu0.b32.cont [7/16] 0.0, 128
  %2015 = vxpose.xlu0.b32.cont [8/16] 0.0, 128
  %2016 = vxpose.xlu0.b32.cont [9/16] 0.0, 128
  %2017 = vxpose.xlu0.b32.cont [10/16] 0.0, 128
  %2018 = vxpose.xlu0.b32.cont [11/16] 0.0, 128
  %2019 = vxpose.xlu0.b32.cont [12/16] 0.0, 128
  %2020 = vxpose.xlu0.b32.cont [13/16] 0.0, 128
  %2021 = vxpose.xlu0.b32.cont [14/16] 0.0, 128
  %2022 = vxpose.xlu0.b32.cont [15/16] 0.0, 128
  %2023 = vxpose.xlu0.b32.end [16/16] 0.0, 128
  %v2024 = vpop.trf.xlu0
  %v2025 = vpop.trf.xlu0
  %v2026 = vpop.trf.xlu0
  %v2027 = vpop.trf.xlu0
  %v2028 = vpop.trf.xlu0
  %v2029 = vpop.trf.xlu0
  %v2030 = vpop.trf.xlu0
  %v2031 = vpop.trf.xlu0
  %v2032 = vpop.trf.xlu0
  %v2033 = vpop.trf.xlu0
  %v2034 = vpop.trf.xlu0
  %v2035 = vpop.trf.xlu0
  %v2036 = vpop.trf.xlu0
  %v2037 = vpop.trf.xlu0
  %v2038 = vpop.trf.xlu0
  %v2039 = vpop.trf.xlu0
  %2040 = vxpose.xlu0.b32.start [1/16] %v1935, 128
  %2041 = vxpose.xlu0.b32.cont [2/16] 0.0, 128
  %2042 = vxpose.xlu0.b32.cont [3/16] 0.0, 128
  %2043 = vxpose.xlu0.b32.cont [4/16] 0.0, 128
  %2044 = vxpose.xlu0.b32.cont [5/16] 0.0, 128
  %2045 = vxpose.xlu0.b32.cont [6/16] 0.0, 128
  %2046 = vxpose.xlu0.b32.cont [7/16] 0.0, 128
  %2047 = vxpose.xlu0.b32.cont [8/16] 0.0, 128
  %2048 = vxpose.xlu0.b32.cont [9/16] 0.0, 128
  %2049 = vxpose.xlu0.b32.cont [10/16] 0.0, 128
  %2050 = vxpose.xlu0.b32.cont [11/16] 0.0, 128
  %2051 = vxpose.xlu0.b32.cont [12/16] 0.0, 128
  %2052 = vxpose.xlu0.b32.cont [13/16] 0.0, 128
  %2053 = vxpose.xlu0.b32.cont [14/16] 0.0, 128
  %2054 = vxpose.xlu0.b32.cont [15/16] 0.0, 128
  %2055 = vxpose.xlu0.b32.end [16/16] 0.0, 128
  %v2056 = vpop.trf.xlu0
  %v2057 = vpop.trf.xlu0
  %v2058 = vpop.trf.xlu0
  %v2059 = vpop.trf.xlu0
  %v2060 = vpop.trf.xlu0
  %v2061 = vpop.trf.xlu0
  %v2062 = vpop.trf.xlu0
  %v2063 = vpop.trf.xlu0
  %v2064 = vpop.trf.xlu0
  %v2065 = vpop.trf.xlu0
  %v2066 = vpop.trf.xlu0
  %v2067 = vpop.trf.xlu0
  %v2068 = vpop.trf.xlu0
  %v2069 = vpop.trf.xlu0
  %v2070 = vpop.trf.xlu0
  %v2071 = vpop.trf.xlu0
  %2072 = vxpose.xlu0.b32.start [1/16] %v1938, 128
  %2073 = vxpose.xlu0.b32.cont [2/16] 0.0, 128
  %2074 = vxpose.xlu0.b32.cont [3/16] 0.0, 128
  %2075 = vxpose.xlu0.b32.cont [4/16] 0.0, 128
  %2076 = vxpose.xlu0.b32.cont [5/16] 0.0, 128
  %2077 = vxpose.xlu0.b32.cont [6/16] 0.0, 128
  %2078 = vxpose.xlu0.b32.cont [7/16] 0.0, 128
  %2079 = vxpose.xlu0.b32.cont [8/16] 0.0, 128
  %2080 = vxpose.xlu0.b32.cont [9/16] 0.0, 128
  %2081 = vxpose.xlu0.b32.cont [10/16] 0.0, 128
  %2082 = vxpose.xlu0.b32.cont [11/16] 0.0, 128
  %2083 = vxpose.xlu0.b32.cont [12/16] 0.0, 128
  %2084 = vxpose.xlu0.b32.cont [13/16] 0.0, 128
  %2085 = vxpose.xlu0.b32.cont [14/16] 0.0, 128
  %2086 = vxpose.xlu0.b32.cont [15/16] 0.0, 128
  %2087 = vxpose.xlu0.b32.end [16/16] 0.0, 128
  %v2088 = vpop.trf.xlu0
  %v2089 = vpop.trf.xlu0
  %v2090 = vpop.trf.xlu0
  %v2091 = vpop.trf.xlu0
  %v2092 = vpop.trf.xlu0
  %v2093 = vpop.trf.xlu0
  %v2094 = vpop.trf.xlu0
  %v2095 = vpop.trf.xlu0
  %v2096 = vpop.trf.xlu0
  %v2097 = vpop.trf.xlu0
  %v2098 = vpop.trf.xlu0
  %v2099 = vpop.trf.xlu0
  %v2100 = vpop.trf.xlu0
  %v2101 = vpop.trf.xlu0
  %v2102 = vpop.trf.xlu0
  %v2103 = vpop.trf.xlu0
  %2104 = vxpose.xlu0.b32.start [1/16] %v1941, 128
  %2105 = vxpose.xlu0.b32.cont [2/16] 0.0, 128
  %2106 = vxpose.xlu0.b32.cont [3/16] 0.0, 128
  %2107 = vxpose.xlu0.b32.cont [4/16] 0.0, 128
  %2108 = vxpose.xlu0.b32.cont [5/16] 0.0, 128
  %2109 = vxpose.xlu0.b32.cont [6/16] 0.0, 128
  %2110 = vxpose.xlu0.b32.cont [7/16] 0.0, 128
  %2111 = vxpose.xlu0.b32.cont [8/16] 0.0, 128
  %2112 = vxpose.xlu0.b32.cont [9/16] 0.0, 128
  %2113 = vxpose.xlu0.b32.cont [10/16] 0.0, 128
  %2114 = vxpose.xlu0.b32.cont [11/16] 0.0, 128
  %2115 = vxpose.xlu0.b32.cont [12/16] 0.0, 128
  %2116 = vxpose.xlu0.b32.cont [13/16] 0.0, 128
  %2117 = vxpose.xlu0.b32.cont [14/16] 0.0, 128
  %2118 = vxpose.xlu0.b32.cont [15/16] 0.0, 128
  %2119 = vxpose.xlu0.b32.end [16/16] 0.0, 128
  %v2120 = vpop.trf.xlu0
  %v2121 = vpop.trf.xlu0
  %v2122 = vpop.trf.xlu0
  %v2123 = vpop.trf.xlu0
  %v2124 = vpop.trf.xlu0
  %v2125 = vpop.trf.xlu0
  %v2126 = vpop.trf.xlu0
  %v2127 = vpop.trf.xlu0
  %v2128 = vpop.trf.xlu0
  %v2129 = vpop.trf.xlu0
  %v2130 = vpop.trf.xlu0
  %v2131 = vpop.trf.xlu0
  %v2132 = vpop.trf.xlu0
  %v2133 = vpop.trf.xlu0
  %v2134 = vpop.trf.xlu0
  %v2135 = vpop.trf.xlu0
  %2136 = vxpose.xlu0.b32.start [1/16] %v1944, 128
  %2137 = vxpose.xlu0.b32.cont [2/16] 0.0, 128
  %2138 = vxpose.xlu0.b32.cont [3/16] 0.0, 128
  %2139 = vxpose.xlu0.b32.cont [4/16] 0.0, 128
  %2140 = vxpose.xlu0.b32.cont [5/16] 0.0, 128
  %2141 = vxpose.xlu0.b32.cont [6/16] 0.0, 128
  %2142 = vxpose.xlu0.b32.cont [7/16] 0.0, 128
  %2143 = vxpose.xlu0.b32.cont [8/16] 0.0, 128
  %2144 = vxpose.xlu0.b32.cont [9/16] 0.0, 128
  %2145 = vxpose.xlu0.b32.cont [10/16] 0.0, 128
  %2146 = vxpose.xlu0.b32.cont [11/16] 0.0, 128
  %2147 = vxpose.xlu0.b32.cont [12/16] 0.0, 128
  %2148 = vxpose.xlu0.b32.cont [13/16] 0.0, 128
  %2149 = vxpose.xlu0.b32.cont [14/16] 0.0, 128
  %2150 = vxpose.xlu0.b32.cont [15/16] 0.0, 128
  %2151 = vxpose.xlu0.b32.end [16/16] 0.0, 128
  %v2152 = vpop.trf.xlu0
  %v2153 = vpop.trf.xlu0
  %v2154 = vpop.trf.xlu0
  %v2155 = vpop.trf.xlu0
  %v2156 = vpop.trf.xlu0
  %v2157 = vpop.trf.xlu0
  %v2158 = vpop.trf.xlu0
  %v2159 = vpop.trf.xlu0
  %v2160 = vpop.trf.xlu0
  %v2161 = vpop.trf.xlu0
  %v2162 = vpop.trf.xlu0
  %v2163 = vpop.trf.xlu0
  %v2164 = vpop.trf.xlu0
  %v2165 = vpop.trf.xlu0
  %v2166 = vpop.trf.xlu0
  %v2167 = vpop.trf.xlu0
  %2168 = vxpose.xlu0.b32.start [1/16] %v1947, 128
  %2169 = vxpose.xlu0.b32.cont [2/16] 0.0, 128
  %2170 = vxpose.xlu0.b32.cont [3/16] 0.0, 128
  %2171 = vxpose.xlu0.b32.cont [4/16] 0.0, 128
  %2172 = vxpose.xlu0.b32.cont [5/16] 0.0, 128
  %2173 = vxpose.xlu0.b32.cont [6/16] 0.0, 128
  %2174 = vxpose.xlu0.b32.cont [7/16] 0.0, 128
  %2175 = vxpose.xlu0.b32.cont [8/16] 0.0, 128
  %2176 = vxpose.xlu0.b32.cont [9/16] 0.0, 128
  %2177 = vxpose.xlu0.b32.cont [10/16] 0.0, 128
  %2178 = vxpose.xlu0.b32.cont [11/16] 0.0, 128
  %2179 = vxpose.xlu0.b32.cont [12/16] 0.0, 128
  %2180 = vxpose.xlu0.b32.cont [13/16] 0.0, 128
  %2181 = vxpose.xlu0.b32.cont [14/16] 0.0, 128
  %2182 = vxpose.xlu0.b32.cont [15/16] 0.0, 128
  %2183 = vxpose.xlu0.b32.end [16/16] 0.0, 128
  %v2184 = vpop.trf.xlu0
  %v2185 = vpop.trf.xlu0
  %v2186 = vpop.trf.xlu0
  %v2187 = vpop.trf.xlu0
  %v2188 = vpop.trf.xlu0
  %v2189 = vpop.trf.xlu0
  %v2190 = vpop.trf.xlu0
  %v2191 = vpop.trf.xlu0
  %v2192 = vpop.trf.xlu0
  %v2193 = vpop.trf.xlu0
  %v2194 = vpop.trf.xlu0
  %v2195 = vpop.trf.xlu0
  %v2196 = vpop.trf.xlu0
  %v2197 = vpop.trf.xlu0
  %v2198 = vpop.trf.xlu0
  %v2199 = vpop.trf.xlu0
  %2200 = vxpose.xlu0.b32.start [1/16] %v1950, 128
  %2201 = vxpose.xlu0.b32.cont [2/16] 0.0, 128
  %2202 = vxpose.xlu0.b32.cont [3/16] 0.0, 128
  %2203 = vxpose.xlu0.b32.cont [4/16] 0.0, 128
  %2204 = vxpose.xlu0.b32.cont [5/16] 0.0, 128
  %2205 = vxpose.xlu0.b32.cont [6/16] 0.0, 128
  %2206 = vxpose.xlu0.b32.cont [7/16] 0.0, 128
  %2207 = vxpose.xlu0.b32.cont [8/16] 0.0, 128
  %2208 = vxpose.xlu0.b32.cont [9/16] 0.0, 128
  %2209 = vxpose.xlu0.b32.cont [10/16] 0.0, 128
  %2210 = vxpose.xlu0.b32.cont [11/16] 0.0, 128
  %2211 = vxpose.xlu0.b32.cont [12/16] 0.0, 128
  %2212 = vxpose.xlu0.b32.cont [13/16] 0.0, 128
  %2213 = vxpose.xlu0.b32.cont [14/16] 0.0, 128
  %2214 = vxpose.xlu0.b32.cont [15/16] 0.0, 128
  %2215 = vxpose.xlu0.b32.end [16/16] 0.0, 128
  %v2216 = vpop.trf.xlu0
  %v2217 = vpop.trf.xlu0
  %v2218 = vpop.trf.xlu0
  %v2219 = vpop.trf.xlu0
  %v2220 = vpop.trf.xlu0
  %v2221 = vpop.trf.xlu0
  %v2222 = vpop.trf.xlu0
  %v2223 = vpop.trf.xlu0
  %v2224 = vpop.trf.xlu0
  %v2225 = vpop.trf.xlu0
  %v2226 = vpop.trf.xlu0
  %v2227 = vpop.trf.xlu0
  %v2228 = vpop.trf.xlu0
  %v2229 = vpop.trf.xlu0
  %v2230 = vpop.trf.xlu0
  %v2231 = vpop.trf.xlu0
  %2232 = vxpose.xlu0.b32.start [1/16] %v1953, 128
  %2233 = vxpose.xlu0.b32.cont [2/16] 0.0, 128
  %2234 = vxpose.xlu0.b32.cont [3/16] 0.0, 128
  %2235 = vxpose.xlu0.b32.cont [4/16] 0.0, 128
  %2236 = vxpose.xlu0.b32.cont [5/16] 0.0, 128
  %2237 = vxpose.xlu0.b32.cont [6/16] 0.0, 128
  %2238 = vxpose.xlu0.b32.cont [7/16] 0.0, 128
  %2239 = vxpose.xlu0.b32.cont [8/16] 0.0, 128
  %2240 = vxpose.xlu0.b32.cont [9/16] 0.0, 128
  %2241 = vxpose.xlu0.b32.cont [10/16] 0.0, 128
  %2242 = vxpose.xlu0.b32.cont [11/16] 0.0, 128
  %2243 = vxpose.xlu0.b32.cont [12/16] 0.0, 128
  %2244 = vxpose.xlu0.b32.cont [13/16] 0.0, 128
  %2245 = vxpose.xlu0.b32.cont [14/16] 0.0, 128
  %2246 = vxpose.xlu0.b32.cont [15/16] 0.0, 128
  %2247 = vxpose.xlu0.b32.end [16/16] 0.0, 128
  %v2248 = vpop.trf.xlu0
  %v2249 = vpop.trf.xlu0
  %v2250 = vpop.trf.xlu0
  %v2251 = vpop.trf.xlu0
  %v2252 = vpop.trf.xlu0
  %v2253 = vpop.trf.xlu0
  %v2254 = vpop.trf.xlu0
  %v2255 = vpop.trf.xlu0
  %v2256 = vpop.trf.xlu0
  %v2257 = vpop.trf.xlu0
  %v2258 = vpop.trf.xlu0
  %v2259 = vpop.trf.xlu0
  %v2260 = vpop.trf.xlu0
  %v2261 = vpop.trf.xlu0
  %v2262 = vpop.trf.xlu0
  %v2263 = vpop.trf.xlu0
  %2264 = vxpose.xlu0.b32.start [1/16] %v1956, 128
  %2265 = vxpose.xlu0.b32.cont [2/16] 0.0, 128
  %2266 = vxpose.xlu0.b32.cont [3/16] 0.0, 128
  %2267 = vxpose.xlu0.b32.cont [4/16] 0.0, 128
  %2268 = vxpose.xlu0.b32.cont [5/16] 0.0, 128
  %2269 = vxpose.xlu0.b32.cont [6/16] 0.0, 128
  %2270 = vxpose.xlu0.b32.cont [7/16] 0.0, 128
  %2271 = vxpose.xlu0.b32.cont [8/16] 0.0, 128
  %2272 = vxpose.xlu0.b32.cont [9/16] 0.0, 128
  %2273 = vxpose.xlu0.b32.cont [10/16] 0.0, 128
  %2274 = vxpose.xlu0.b32.cont [11/16] 0.0, 128
  %2275 = vxpose.xlu0.b32.cont [12/16] 0.0, 128
  %2276 = vxpose.xlu0.b32.cont [13/16] 0.0, 128
  %2277 = vxpose.xlu0.b32.cont [14/16] 0.0, 128
  %2278 = vxpose.xlu0.b32.cont [15/16] 0.0, 128
  %2279 = vxpose.xlu0.b32.end [16/16] 0.0, 128
  %v2280 = vpop.trf.xlu0
  %v2281 = vpop.trf.xlu0
  %v2282 = vpop.trf.xlu0
  %v2283 = vpop.trf.xlu0
  %v2284 = vpop.trf.xlu0
  %v2285 = vpop.trf.xlu0
  %v2286 = vpop.trf.xlu0
  %v2287 = vpop.trf.xlu0
  %v2288 = vpop.trf.xlu0
  %v2289 = vpop.trf.xlu0
  %v2290 = vpop.trf.xlu0
  %v2291 = vpop.trf.xlu0
  %v2292 = vpop.trf.xlu0
  %v2293 = vpop.trf.xlu0
  %v2294 = vpop.trf.xlu0
  %v2295 = vpop.trf.xlu0
  %2296 = vxpose.xlu0.b32.start [1/16] %v1959, 128
  %2297 = vxpose.xlu0.b32.cont [2/16] 0.0, 128
  %2298 = vxpose.xlu0.b32.cont [3/16] 0.0, 128
  %2299 = vxpose.xlu0.b32.cont [4/16] 0.0, 128
  %2300 = vxpose.xlu0.b32.cont [5/16] 0.0, 128
  %2301 = vxpose.xlu0.b32.cont [6/16] 0.0, 128
  %2302 = vxpose.xlu0.b32.cont [7/16] 0.0, 128
  %2303 = vxpose.xlu0.b32.cont [8/16] 0.0, 128
  %2304 = vxpose.xlu0.b32.cont [9/16] 0.0, 128
  %2305 = vxpose.xlu0.b32.cont [10/16] 0.0, 128
  %2306 = vxpose.xlu0.b32.cont [11/16] 0.0, 128
  %2307 = vxpose.xlu0.b32.cont [12/16] 0.0, 128
  %2308 = vxpose.xlu0.b32.cont [13/16] 0.0, 128
  %2309 = vxpose.xlu0.b32.cont [14/16] 0.0, 128
  %2310 = vxpose.xlu0.b32.cont [15/16] 0.0, 128
  %2311 = vxpose.xlu0.b32.end [16/16] 0.0, 128
  %v2312 = vpop.trf.xlu0
  %v2313 = vpop.trf.xlu0
  %v2314 = vpop.trf.xlu0
  %v2315 = vpop.trf.xlu0
  %v2316 = vpop.trf.xlu0
  %v2317 = vpop.trf.xlu0
  %v2318 = vpop.trf.xlu0
  %v2319 = vpop.trf.xlu0
  %v2320 = vpop.trf.xlu0
  %v2321 = vpop.trf.xlu0
  %v2322 = vpop.trf.xlu0
  %v2323 = vpop.trf.xlu0
  %v2324 = vpop.trf.xlu0
  %v2325 = vpop.trf.xlu0
  %v2326 = vpop.trf.xlu0
  %v2327 = vpop.trf.xlu0
  %2328 = vxpose.xlu0.b32.start [1/16] %v1962, 128
  %2329 = vxpose.xlu0.b32.cont [2/16] 0.0, 128
  %2330 = vxpose.xlu0.b32.cont [3/16] 0.0, 128
  %2331 = vxpose.xlu0.b32.cont [4/16] 0.0, 128
  %2332 = vxpose.xlu0.b32.cont [5/16] 0.0, 128
  %2333 = vxpose.xlu0.b32.cont [6/16] 0.0, 128
  %2334 = vxpose.xlu0.b32.cont [7/16] 0.0, 128
  %2335 = vxpose.xlu0.b32.cont [8/16] 0.0, 128
  %2336 = vxpose.xlu0.b32.cont [9/16] 0.0, 128
  %2337 = vxpose.xlu0.b32.cont [10/16] 0.0, 128
  %2338 = vxpose.xlu0.b32.cont [11/16] 0.0, 128
  %2339 = vxpose.xlu0.b32.cont [12/16] 0.0, 128
  %2340 = vxpose.xlu0.b32.cont [13/16] 0.0, 128
  %2341 = vxpose.xlu0.b32.cont [14/16] 0.0, 128
  %2342 = vxpose.xlu0.b32.cont [15/16] 0.0, 128
  %2343 = vxpose.xlu0.b32.end [16/16] 0.0, 128
  %v2344 = vpop.trf.xlu0
  %v2345 = vpop.trf.xlu0
  %v2346 = vpop.trf.xlu0
  %v2347 = vpop.trf.xlu0
  %v2348 = vpop.trf.xlu0
  %v2349 = vpop.trf.xlu0
  %v2350 = vpop.trf.xlu0
  %v2351 = vpop.trf.xlu0
  %v2352 = vpop.trf.xlu0
  %v2353 = vpop.trf.xlu0
  %v2354 = vpop.trf.xlu0
  %v2355 = vpop.trf.xlu0
  %v2356 = vpop.trf.xlu0
  %v2357 = vpop.trf.xlu0
  %v2358 = vpop.trf.xlu0
  %v2359 = vpop.trf.xlu0
  %2360 = vxpose.xlu0.b32.start [1/16] %v1965, 128
  %2361 = vxpose.xlu0.b32.cont [2/16] 0.0, 128
  %2362 = vxpose.xlu0.b32.cont [3/16] 0.0, 128
  %2363 = vxpose.xlu0.b32.cont [4/16] 0.0, 128
  %2364 = vxpose.xlu0.b32.cont [5/16] 0.0, 128
  %2365 = vxpose.xlu0.b32.cont [6/16] 0.0, 128
  %2366 = vxpose.xlu0.b32.cont [7/16] 0.0, 128
  %2367 = vxpose.xlu0.b32.cont [8/16] 0.0, 128
  %2368 = vxpose.xlu0.b32.cont [9/16] 0.0, 128
  %2369 = vxpose.xlu0.b32.cont [10/16] 0.0, 128
  %2370 = vxpose.xlu0.b32.cont [11/16] 0.0, 128
  %2371 = vxpose.xlu0.b32.cont [12/16] 0.0, 128
  %2372 = vxpose.xlu0.b32.cont [13/16] 0.0, 128
  %2373 = vxpose.xlu0.b32.cont [14/16] 0.0, 128
  %2374 = vxpose.xlu0.b32.cont [15/16] 0.0, 128
  %2375 = vxpose.xlu0.b32.end [16/16] 0.0, 128
  %v2376 = vpop.trf.xlu0
  %v2377 = vpop.trf.xlu0
  %v2378 = vpop.trf.xlu0
  %v2379 = vpop.trf.xlu0
  %v2380 = vpop.trf.xlu0
  %v2381 = vpop.trf.xlu0
  %v2382 = vpop.trf.xlu0
  %v2383 = vpop.trf.xlu0
  %v2384 = vpop.trf.xlu0
  %v2385 = vpop.trf.xlu0
  %v2386 = vpop.trf.xlu0
  %v2387 = vpop.trf.xlu0
  %v2388 = vpop.trf.xlu0
  %v2389 = vpop.trf.xlu0
  %v2390 = vpop.trf.xlu0
  %v2391 = vpop.trf.xlu0
  %2392 = vxpose.xlu0.b32.start [1/16] %v1968, 128
  %2393 = vxpose.xlu0.b32.cont [2/16] 0.0, 128
  %2394 = vxpose.xlu0.b32.cont [3/16] 0.0, 128
  %2395 = vxpose.xlu0.b32.cont [4/16] 0.0, 128
  %2396 = vxpose.xlu0.b32.cont [5/16] 0.0, 128
  %2397 = vxpose.xlu0.b32.cont [6/16] 0.0, 128
  %2398 = vxpose.xlu0.b32.cont [7/16] 0.0, 128
  %2399 = vxpose.xlu0.b32.cont [8/16] 0.0, 128
  %2400 = vxpose.xlu0.b32.cont [9/16] 0.0, 128
  %2401 = vxpose.xlu0.b32.cont [10/16] 0.0, 128
  %2402 = vxpose.xlu0.b32.cont [11/16] 0.0, 128
  %2403 = vxpose.xlu0.b32.cont [12/16] 0.0, 128
  %2404 = vxpose.xlu0.b32.cont [13/16] 0.0, 128
  %2405 = vxpose.xlu0.b32.cont [14/16] 0.0, 128
  %2406 = vxpose.xlu0.b32.cont [15/16] 0.0, 128
  %2407 = vxpose.xlu0.b32.end [16/16] 0.0, 128
  %v2408 = vpop.trf.xlu0
  %v2409 = vpop.trf.xlu0
  %v2410 = vpop.trf.xlu0
  %v2411 = vpop.trf.xlu0
  %v2412 = vpop.trf.xlu0
  %v2413 = vpop.trf.xlu0
  %v2414 = vpop.trf.xlu0
  %v2415 = vpop.trf.xlu0
  %v2416 = vpop.trf.xlu0
  %v2417 = vpop.trf.xlu0
  %v2418 = vpop.trf.xlu0
  %v2419 = vpop.trf.xlu0
  %v2420 = vpop.trf.xlu0
  %v2421 = vpop.trf.xlu0
  %v2422 = vpop.trf.xlu0
  %v2423 = vpop.trf.xlu0
  %2424 = vxpose.xlu0.b32.start [1/16] %v1971, 128
  %2425 = vxpose.xlu0.b32.cont [2/16] 0.0, 128
  %2426 = vxpose.xlu0.b32.cont [3/16] 0.0, 128
  %2427 = vxpose.xlu0.b32.cont [4/16] 0.0, 128
  %2428 = vxpose.xlu0.b32.cont [5/16] 0.0, 128
  %2429 = vxpose.xlu0.b32.cont [6/16] 0.0, 128
  %2430 = vxpose.xlu0.b32.cont [7/16] 0.0, 128
  %2431 = vxpose.xlu0.b32.cont [8/16] 0.0, 128
  %2432 = vxpose.xlu0.b32.cont [9/16] 0.0, 128
  %2433 = vxpose.xlu0.b32.cont [10/16] 0.0, 128
  %2434 = vxpose.xlu0.b32.cont [11/16] 0.0, 128
  %2435 = vxpose.xlu0.b32.cont [12/16] 0.0, 128
  %2436 = vxpose.xlu0.b32.cont [13/16] 0.0, 128
  %2437 = vxpose.xlu0.b32.cont [14/16] 0.0, 128
  %2438 = vxpose.xlu0.b32.cont [15/16] 0.0, 128
  %2439 = vxpose.xlu0.b32.end [16/16] 0.0, 128
  %v2440 = vpop.trf.xlu0
  %v2441 = vpop.trf.xlu0
  %v2442 = vpop.trf.xlu0
  %v2443 = vpop.trf.xlu0
  %v2444 = vpop.trf.xlu0
  %v2445 = vpop.trf.xlu0
  %v2446 = vpop.trf.xlu0
  %v2447 = vpop.trf.xlu0
  %v2448 = vpop.trf.xlu0
  %v2449 = vpop.trf.xlu0
  %v2450 = vpop.trf.xlu0
  %v2451 = vpop.trf.xlu0
  %v2452 = vpop.trf.xlu0
  %v2453 = vpop.trf.xlu0
  %v2454 = vpop.trf.xlu0
  %v2455 = vpop.trf.xlu0
  %2456 = vxpose.xlu0.b32.start [1/16] %v1974, 128
  %2457 = vxpose.xlu0.b32.cont [2/16] 0.0, 128
  %2458 = vxpose.xlu0.b32.cont [3/16] 0.0, 128
  %2459 = vxpose.xlu0.b32.cont [4/16] 0.0, 128
  %2460 = vxpose.xlu0.b32.cont [5/16] 0.0, 128
  %2461 = vxpose.xlu0.b32.cont [6/16] 0.0, 128
  %2462 = vxpose.xlu0.b32.cont [7/16] 0.0, 128
  %2463 = vxpose.xlu0.b32.cont [8/16] 0.0, 128
  %2464 = vxpose.xlu0.b32.cont [9/16] 0.0, 128
  %2465 = vxpose.xlu0.b32.cont [10/16] 0.0, 128
  %2466 = vxpose.xlu0.b32.cont [11/16] 0.0, 128
  %2467 = vxpose.xlu0.b32.cont [12/16] 0.0, 128
  %2468 = vxpose.xlu0.b32.cont [13/16] 0.0, 128
  %2469 = vxpose.xlu0.b32.cont [14/16] 0.0, 128
  %2470 = vxpose.xlu0.b32.cont [15/16] 0.0, 128
  %2471 = vxpose.xlu0.b32.end [16/16] 0.0, 128
  %v2472 = vpop.trf.xlu0
  %v2473 = vpop.trf.xlu0
  %v2474 = vpop.trf.xlu0
  %v2475 = vpop.trf.xlu0
  %v2476 = vpop.trf.xlu0
  %v2477 = vpop.trf.xlu0
  %v2478 = vpop.trf.xlu0
  %v2479 = vpop.trf.xlu0
  %v2480 = vpop.trf.xlu0
  %v2481 = vpop.trf.xlu0
  %v2482 = vpop.trf.xlu0
  %v2483 = vpop.trf.xlu0
  %v2484 = vpop.trf.xlu0
  %v2485 = vpop.trf.xlu0
  %v2486 = vpop.trf.xlu0
  %v2487 = vpop.trf.xlu0
  %2488 = vst.msk [vmem:[%s3] sm:$0xff] %vm617, %v1992
  %2489 = vst.msk [vmem:[%s3 + $0x8] sm:$0xff] %vm617, %v1993
  %2490 = vst.msk [vmem:[%s3 + $0x10] sm:$0xff] %vm617, %v2024
  %2491 = vst.msk [vmem:[%s3 + $0x18] sm:$0xff] %vm617, %v2025
  %2492 = vst.msk [vmem:[%s3 + $0x20] sm:$0xff] %vm617, %v2056
  %2493 = vst.msk [vmem:[%s3 + $0x28] sm:$0xff] %vm617, %v2057
  %2494 = vst.msk [vmem:[%s3 + $0x30] sm:$0xff] %vm617, %v2088
  %2495 = vst.msk [vmem:[%s3 + $0x38] sm:$0xff] %vm617, %v2089
  %2496 = vst.msk [vmem:[%s3 + $0x40] sm:$0xff] %vm617, %v2120
  %2497 = vst.msk [vmem:[%s3 + $0x48] sm:$0xff] %vm617, %v2121
  %2498 = vst.msk [vmem:[%s3 + $0x50] sm:$0xff] %vm617, %v2152
  %2499 = vst.msk [vmem:[%s3 + $0x58] sm:$0xff] %vm617, %v2153
  %2500 = vst.msk [vmem:[%s3 + $0x60] sm:$0xff] %vm617, %v2184
  %2501 = vst.msk [vmem:[%s3 + $0x68] sm:$0xff] %vm617, %v2185
  %2502 = vst.msk [vmem:[%s3 + $0x70] sm:$0xff] %vm617, %v2216
  %2503 = vst.msk [vmem:[%s3 + $0x78] sm:$0xff] %vm617, %v2217
  %2504 = vst.msk [vmem:[%s3 + $0x80] sm:$0xff] %vm617, %v2248
  %2505 = vst.msk [vmem:[%s3 + $0x88] sm:$0xff] %vm617, %v2249
  %2506 = vst.msk [vmem:[%s3 + $0x90] sm:$0xff] %vm617, %v2280
  %2507 = vst.msk [vmem:[%s3 + $0x98] sm:$0xff] %vm617, %v2281
  %2508 = vst.msk [vmem:[%s3 + $0xa0] sm:$0xff] %vm617, %v2312
  %2509 = vst.msk [vmem:[%s3 + $0xa8] sm:$0xff] %vm617, %v2313
  %2510 = vst.msk [vmem:[%s3 + $0xb0] sm:$0xff] %vm617, %v2344
  %2511 = vst.msk [vmem:[%s3 + $0xb8] sm:$0xff] %vm617, %v2345
  %2512 = vst.msk [vmem:[%s3 + $0xc0] sm:$0xff] %vm617, %v2376
  %2513 = vst.msk [vmem:[%s3 + $0xc8] sm:$0xff] %vm617, %v2377
  %2514 = vst.msk [vmem:[%s3 + $0xd0] sm:$0xff] %vm617, %v2408
  %2515 = vst.msk [vmem:[%s3 + $0xd8] sm:$0xff] %vm617, %v2409
  %2516 = vst.msk [vmem:[%s3 + $0xe0] sm:$0xff] %vm617, %v2440
  %2517 = vst.msk [vmem:[%s3 + $0xe8] sm:$0xff] %vm617, %v2441
  %2518 = vst.msk [vmem:[%s3 + $0xf0] sm:$0xff] %vm617, %v2472
  %2519 = vst.msk [vmem:[%s3 + $0xf8] sm:$0xff] %vm617, %v2473
  // Predicated region
  $region14: #{tpu_custom_call.1} parent=0 // pred_check
    _
  $region15: #{tpu_custom_call.1} parent=0 // pred_check_branch
    %2521 = sbr.rel (0) target = $region17
  $region16: #{tpu_custom_call.1} parent=0 // pred_region
    _
  $region17: #{tpu_custom_call.1} parent=0 // pred_fallthru
    _
  // Predicated region
  $region18: #{tpu_custom_call.1} parent=0 // pred_check
    _
  $region19: #{tpu_custom_call.1} parent=0 // pred_check_branch
    %2523 = sbr.rel (0) target = $region21
  $region20: #{tpu_custom_call.1} parent=0 // pred_region
    _
  $region21: #{tpu_custom_call.1} parent=0 // pred_fallthru
    _

</llo_original>
